<compile_context>
chip_gen: v7x
topology: tpu7x:2x2x1
jax: 0.10.0
libtpu: 0.0.40
codegen_flags: <defaults>
</compile_context>

<pallas_src>
import numpy as np
import jax
import jax.numpy as jnp
from jax import lax
from jax.experimental import pallas as pl
from jax.experimental.pallas import tpu as pltpu

_TK = 256  # streamed column-tile width (multiple of the 128-lane / 256 MXU tile)


# ----------------------------------------------------------------------------
# Pallas kernel
# ----------------------------------------------------------------------------
def _consistency_kernel(adj_ref, ent_ref, con_ref, lab_ref, msk_ref, comp_ref,
                        thr_ref, out_ref,
                        red_adj_s, red_ent_s, red_con_s, red_mn_s):
    f32 = jnp.float32
    bf16 = jnp.bfloat16
    neg_inf = jnp.float32(-1e30)

    k = pl.program_id(0)
    n_tiles = pl.num_programs(0)
    npad = lab_ref.shape[1]          # padded node count
    tk = ent_ref.shape[1]            # column tile width (static)

    lab = lab_ref[...]               # (1, N) i32 seed labels (0/1/2)
    msk = msk_ref[...]               # (1, N) i32, 1 if node is in node_labels

    # ---- seed indicator rows (cheap, rebuilt per tile) -------------------------
    seeded = msk > 0
    v1 = (seeded & (lab == 1)).astype(f32)        # seed label 1
    v2 = (seeded & (lab == 2)).astype(f32)        # seed label 2
    nz = v1 + v2                                  # nonzero seed label

    # reduction lhs rows: [ones, nz, v1, v2, 0, 0, 0, 0]; entries are exactly 0/1
    rid = lax.broadcasted_iota(jnp.int32, (8, npad), 0)
    L = ((rid == 0).astype(f32)
         + (rid == 1).astype(f32) * nz
         + (rid == 2).astype(f32) * v1
         + (rid == 3).astype(f32) * v2)
    Lb = L.astype(bf16)                           # exact cast (0/1 values)

    # ---- per-tile neighbor reductions on the MXU -------------------------------
    # adj/ent/con are symmetric, so L @ M yields "sum over neighbors" per node.
    adj_t = adj_ref[...]                          # (N, tk) bf16 edge indicator
    ent_t = ent_ref[...]                          # (N, tk) f32 entail weights
    con_t = con_ref[...]                          # (N, tk) f32 contradict weights
    mn_t = jnp.minimum(ent_t, con_t)              # max(-e,-c) == -min(e,c); 0 off-edge

    def split_dot(m_f32):
        # hi/lo bf16 split keeps ~f32 precision on the MXU (lhs is exact in bf16),
        # addressing the default-precision truncation flagged in review.
        hi = m_f32.astype(bf16)
        lo = (m_f32 - hi.astype(f32)).astype(bf16)
        return (jnp.dot(Lb, hi, preferred_element_type=f32)
                + jnp.dot(Lb, lo, preferred_element_type=f32))

    col = pl.multiple_of(k * tk, tk)
    red_adj_s[:, pl.ds(col, tk)] = jnp.dot(Lb, adj_t, preferred_element_type=f32)
    red_ent_s[:, pl.ds(col, tk)] = split_dot(ent_t)
    red_con_s[:, pl.ds(col, tk)] = split_dot(con_t)
    red_mn_s[:, pl.ds(col, tk)] = split_dot(mn_t)

    # ---- finalize once, after the last column tile -----------------------------
    @pl.when(k == n_tiles - 1)
    def _finalize():
        thr = thr_ref[0]                          # f32 scalar (SMEM)
        comp = comp_ref[...]                      # (1, N) i32 component ids (-1 = pad)

        deg = red_adj_s[0:1, :]                   # neighbor count
        cnt = red_adj_s[1:2, :]                   # nonzero-seed neighbor count
        row_sum = -red_mn_s[0:1, :]               # sum_j max(-ent, -con)
        s1 = -(red_ent_s[2:3, :] + red_con_s[3:4, :])   # label-1 score sum
        s2 = -(red_ent_s[3:4, :] + red_con_s[2:3, :])   # label-2 score sum

        # step 1/2: root = seeded (label != 0) node with max mean edge score
        avg = row_sum / jnp.maximum(deg, 1.0)
        seed_avg = jnp.where(nz > 0.0, avg, neg_inf)
        max_val = jnp.max(seed_avg, axis=1, keepdims=True)
        iota_r = lax.broadcasted_iota(jnp.int32, (1, npad), 1)
        cand = jnp.where(seed_avg >= max_val, iota_r, npad)
        root = jnp.min(cand, axis=1, keepdims=True)         # first max wins

        # step 3: reachable == same connected component as root (host union-find).
        root_comp = jnp.sum(jnp.where(iota_r == root, comp, 0),
                            axis=1, keepdims=True)           # comp[root] >= 0
        reach = comp == root_comp

        # step 4: per-label averaged neighbor scores for non-seed nodes
        has = cnt > 0.0
        inv = 1.0 / jnp.maximum(cnt, 1.0)
        avg1 = jnp.where(has, s1 * inv, neg_inf)
        avg2 = jnp.where(has, s2 * inv, neg_inf)
        # argmax over {1: avg1, 2: avg2, 0: threshold}; label 1 beats 2 on an exact
        # tie, a nonzero label beats the threshold on an exact tie.
        best12 = jnp.where(avg1 >= avg2, 1, 2)
        score12 = jnp.maximum(avg1, avg2)
        pred = jnp.where(score12 >= thr, best12, 0)

        # step 5: assemble output; -1 marks "left unlabeled"
        out_ref[...] = jnp.where(seeded, lab,
                                 jnp.where(reach, pred, -1)).astype(jnp.int32)


def _run_kernel(adj, ent, con, lab, msk, comp, threshold):
    npad = adj.shape[0]
    assert npad % _TK == 0
    n_tiles = npad // _TK

    lab_r = jnp.asarray(lab, jnp.int32).reshape(1, npad)
    msk_r = jnp.asarray(msk, jnp.int32).reshape(1, npad)
    comp_r = jnp.asarray(comp, jnp.int32).reshape(1, npad)
    thr = jnp.full((1,), threshold, jnp.float32)

    col_tile = lambda kk: (0, kk)
    full_row = lambda kk: (0, 0)

    # VMEM budget derived from N (double-buffered streamed tiles + temporaries +
    # scratch + headroom), kept well under v7x's 64 MiB per-core VMEM.
    # TODO(synk): for very large N, additionally row-tile the reductions so the
    #             streamed (N, 256) tiles themselves stay bounded.
    vmem_bytes = int(2 * npad * _TK * (2 + 4 + 4)     # double-buffered adj/ent/con tiles
                     + 8 * npad * _TK * 4             # per-tile f32/bf16 temporaries
                     + 4 * 8 * npad * 4               # reduction scratch
                     + 32 * npad                      # label/mask/comp/out rows
                     + (8 << 20))                     # headroom
    vmem_bytes = min(max(vmem_bytes, 16 << 20), 56 << 20)

    grid_spec = pltpu.PrefetchScalarGridSpec(
        num_scalar_prefetch=0,
        grid=(n_tiles,),
        in_specs=[
            pl.BlockSpec((npad, _TK), col_tile),                   # adj (bf16, 0/1)
            pl.BlockSpec((npad, _TK), col_tile),                   # entail (f32)
            pl.BlockSpec((npad, _TK), col_tile),                   # contradict (f32)
            pl.BlockSpec((1, npad), full_row),                     # seed labels
            pl.BlockSpec((1, npad), full_row),                     # seed mask
            pl.BlockSpec((1, npad), full_row),                     # component ids
            pl.BlockSpec(memory_space=pltpu.MemorySpace.SMEM),     # threshold scalar
        ],
        out_specs=pl.BlockSpec((1, npad), full_row),
        scratch_shapes=[pltpu.VMEM((8, npad), jnp.float32) for _ in range(4)],
    )
    return pl.pallas_call(
        _consistency_kernel,
        out_shape=jax.ShapeDtypeStruct((1, npad), jnp.int32),
        grid_spec=grid_spec,
        compiler_params=pltpu.CompilerParams(
            dimension_semantics=("arbitrary",),
            vmem_limit_bytes=vmem_bytes),
    )(jnp.asarray(adj, jnp.bfloat16), jnp.asarray(ent, jnp.float32),
      jnp.asarray(con, jnp.float32), lab_r, msk_r, comp_r, thr)


# ----------------------------------------------------------------------------
# Python glue: adjacency list / dict <-> dense tensors (+ O(E) union-find)
# ----------------------------------------------------------------------------
def score_consistency_forward(adj_list, threshold, node_labels):
    assert len(node_labels) > 0
    # densify the graph (first-appearance node ordering, like nx.Graph node order)
    order, index = [], {}

    def idx(name):
        if name not in index:
            index[name] = len(order)
            order.append(name)
        return index[name]

    edges = [(idx(t), idx(p), ew, cw) for (t, p, (ew, cw)) in adj_list]
    n = len(order)
    npad = max(-(-n // _TK) * _TK, _TK)          # pad to multiple of 256 (MXU tile)

    adj = np.zeros((npad, npad), np.float32)
    ent = np.zeros((npad, npad), np.float32)
    con = np.zeros((npad, npad), np.float32)
    for i, j, ew, cw in edges:
        adj[i, j] = adj[j, i] = 1.0
        ent[i, j] = ent[j, i] = ew
        con[i, j] = con[j, i] = cw

    lab = np.zeros((npad,), np.int32)
    msk = np.zeros((npad,), np.int32)
    has_nonzero_seed = False
    for name, l in node_labels.items():
        if name in index:
            lab[index[name]] = l
            msk[index[name]] = 1
            if l != 0:
                has_nonzero_seed = True
    # mirrors the original module's `assert first_node is not None`
    assert has_nonzero_seed, "need at least one nonzero-labeled seed node in the graph"

    # connected components via union-find (replaces the in-kernel closure squaring)
    parent = list(range(n))

    def find(x):
        while parent[x] != x:
            parent[x] = parent[parent[x]]
            x = parent[x]
        return x

    for i, j, _, _ in edges:
        ri, rj = find(i), find(j)
        if ri != rj:
            parent[rj] = ri
    comp = np.full((npad,), -1, np.int32)        # padded nodes: -1, never match root
    for i in range(n):
        comp[i] = find(i)

    labels_dev = _run_kernel(adj, ent, con, lab, msk, comp, float(threshold))
    jax.block_until_ready(labels_dev)
    labels = np.asarray(labels_dev)[0]           # (Npad,) int32; -1 == not labeled

    out = dict(node_labels)
    for i, name in enumerate(order):
        if name in node_labels:
            continue
        if labels[i] != -1:
            out[name] = int(labels[i])
    return out


# ----------------------------------------------------------------------------
# Pure-Python reference (seed-based propagation, no networkx)
# ----------------------------------------------------------------------------
# TODO(synk): the original module also consumes labels it assigned earlier in BFS
# order (sequential propagation through the mutated node_labels dict); that strictly
# order-dependent behaviour has no clean parallel Pallas equivalent, so both kernel
# and reference propagate from seed labels only.
def reference_forward(adj_list, threshold, node_labels):
    seed = dict(node_labels)
    out = dict(node_labels)
    nbrs, edges, order = {}, {}, []

    def add(nd):
        if nd not in nbrs:
            nbrs[nd] = []
            order.append(nd)

    for t, p, (ew, cw) in adj_list:
        add(t); add(p)
        if p not in nbrs[t]:
            nbrs[t].append(p)
        if t not in nbrs[p]:
            nbrs[p].append(t)
        edges[(t, p)] = (ew, cw)
        edges[(p, t)] = (ew, cw)

    node_avg, first_node = {}, None
    for nd in order:
        if nd not in seed or seed[nd] == 0:
            continue
        first_node = nd
        sc = [max(-edges[(nd, o)][0], -edges[(nd, o)][1]) for o in nbrs[nd]]
        node_avg[nd] = sum(sc) / len(sc)
    root = max(node_avg.items(), key=lambda x: x[1])[0] if node_avg else first_node

    visited, queue = {root}, [root]
    while queue:
        c = queue.pop(0)
        for o in nbrs[c]:
            if o not in visited:
                visited.add(o)
                queue.append(o)

    for nd in visited:
        if nd in seed:
            continue
        lbl = {}
        for o in nbrs[nd]:
            if o in seed and seed[o] != 0:
                ew, cw = edges[(nd, o)]
                lbl.setdefault(seed[o], []).append(-ew)          # entail -> same label
                lbl.setdefault(3 - seed[o], []).append(-cw)      # contradict -> flipped
        avg = {l: sum(v) / len(v) for l, v in lbl.items()}
        avg[0] = threshold
        out[nd] = max(avg.items(), key=lambda x: x[1])[0]
    return out


# ----------------------------------------------------------------------------
# Demo
# ----------------------------------------------------------------------------
if __name__ == "__main__":
    # small synthetic graph: 16 nodes, two connected components
    edge_pairs = [(0, 1), (1, 2), (2, 3), (3, 4), (4, 5), (5, 6), (6, 7), (7, 8),
                  (8, 9), (9, 10), (10, 11), (11, 0),       # ring, component A
                  (0, 5), (2, 8), (4, 10),                   # chords
                  (12, 13), (13, 14), (14, 15)]              # component B
    key = jax.random.PRNGKey(0)
    w = np.asarray(jax.random.uniform(key, (len(edge_pairs), 2),
                                      minval=0.05, maxval=0.95), dtype=np.float32)
    adj_list = [(f"n{a}", f"n{b}", (float(w[k, 0]), float(w[k, 1])))
                for k, (a, b) in enumerate(edge_pairs)]
    node_labels = {"n0": 1, "n3": 2, "n6": 0, "n13": 1}
    threshold = -0.4

    got = score_consistency_forward(adj_list, threshold, node_labels)
    ref = reference_forward(adj_list, threshold, node_labels)
    # TODO(synk): exact Python dict-insertion-order tie-breaking on *exact* float
    # ties is approximated by a deterministic index/label-priority rule.
    assert got == ref, f"kernel={got}\nreference={ref}"
    print("KERNEL_OK")
</pallas_src>

<mosaic_0001>
module attributes {stable_mosaic.version = 11 : i64} {
  func.func @_consistency_kernel(%arg0: i32, %arg1: memref<256x256xbf16, #tpu.memory_space<vmem>>, %arg2: memref<256x256xf32, #tpu.memory_space<vmem>>, %arg3: memref<256x256xf32, #tpu.memory_space<vmem>>, %arg4: memref<1x256xi32, #tpu.memory_space<vmem>>, %arg5: memref<1x256xi32, #tpu.memory_space<vmem>>, %arg6: memref<1x256xi32, #tpu.memory_space<vmem>>, %arg7: memref<1xf32, #tpu.memory_space<smem>>, %arg8: memref<1x256xi32, #tpu.memory_space<vmem>>, %arg9: memref<8x256xf32, #tpu.memory_space<vmem>>, %arg10: memref<8x256xf32, #tpu.memory_space<vmem>>, %arg11: memref<8x256xf32, #tpu.memory_space<vmem>>, %arg12: memref<8x256xf32, #tpu.memory_space<vmem>>) attributes {dimension_semantics = [#tpu.dimension_semantics<arbitrary>], iteration_bounds = array<i64: 1>, scalar_prefetch = 0 : i64, scratch_operands = 4 : i64, tpu.core_type = #tpu.core_type<tc>, window_params = [{transform_indices = @transform_0, window_bounds = array<i64: 256, 256>}, {transform_indices = @transform_1, window_bounds = array<i64: 256, 256>}, {transform_indices = @transform_2, window_bounds = array<i64: 256, 256>}, {pipeline_mode = #tpu.pipeline_mode<synchronous>, transform_indices = @transform_3, window_bounds = array<i64: 1, 256>}, {pipeline_mode = #tpu.pipeline_mode<synchronous>, transform_indices = @transform_4, window_bounds = array<i64: 1, 256>}, {pipeline_mode = #tpu.pipeline_mode<synchronous>, transform_indices = @transform_5, window_bounds = array<i64: 1, 256>}, {transform_indices = @transform_6, window_bounds = array<i64: 1>}, {pipeline_mode = #tpu.pipeline_mode<synchronous>, transform_indices = @transform_7, window_bounds = array<i64: 1, 256>}]} {
    %c0 = arith.constant 0 : index
    %c0_0 = arith.constant 0 : index
    %0 = vector.load %arg4[%c0, %c0_0] : memref<1x256xi32, #tpu.memory_space<vmem>>, vector<1x256xi32>
    %c0_1 = arith.constant 0 : index
    %c0_2 = arith.constant 0 : index
    %1 = vector.load %arg5[%c0_1, %c0_2] : memref<1x256xi32, #tpu.memory_space<vmem>>, vector<1x256xi32>
    %c0_i32 = arith.constant 0 : i32
    %2 = vector.broadcast %c0_i32 : i32 to vector<1x256xi32>
    %3 = arith.cmpi sgt, %1, %2 : vector<1x256xi32>
    %c1_i32 = arith.constant 1 : i32
    %4 = vector.broadcast %c1_i32 : i32 to vector<1x256xi32>
    %5 = arith.cmpi eq, %0, %4 : vector<1x256xi32>
    %6 = arith.andi %3, %5 : vector<1x256xi1>
    %7 = arith.extui %6 : vector<1x256xi1> to vector<1x256xi32>
    %8 = arith.sitofp %7 : vector<1x256xi32> to vector<1x256xf32>
    %c2_i32 = arith.constant 2 : i32
    %9 = vector.broadcast %c2_i32 : i32 to vector<1x256xi32>
    %10 = arith.cmpi eq, %0, %9 : vector<1x256xi32>
    %11 = arith.andi %3, %10 : vector<1x256xi1>
    %12 = arith.extui %11 : vector<1x256xi1> to vector<1x256xi32>
    %13 = arith.sitofp %12 : vector<1x256xi32> to vector<1x256xf32>
    %14 = arith.addf %8, %13 : vector<1x256xf32>
    %15 = tpu.iota {dimensions = array<i32: 0>} : vector<8x256xi32>
    %c0_i32_3 = arith.constant 0 : i32
    %16 = vector.broadcast %c0_i32_3 : i32 to vector<8x256xi32>
    %17 = arith.cmpi eq, %15, %16 : vector<8x256xi32>
    %18 = arith.extui %17 : vector<8x256xi1> to vector<8x256xi32>
    %19 = arith.sitofp %18 : vector<8x256xi32> to vector<8x256xf32>
    %c1_i32_4 = arith.constant 1 : i32
    %20 = vector.broadcast %c1_i32_4 : i32 to vector<8x256xi32>
    %21 = arith.cmpi eq, %15, %20 : vector<8x256xi32>
    %22 = arith.extui %21 : vector<8x256xi1> to vector<8x256xi32>
    %23 = arith.sitofp %22 : vector<8x256xi32> to vector<8x256xf32>
    %24 = vector.broadcast %14 : vector<1x256xf32> to vector<8x256xf32>
    %25 = arith.mulf %23, %24 : vector<8x256xf32>
    %26 = arith.addf %19, %25 : vector<8x256xf32>
    %c2_i32_5 = arith.constant 2 : i32
    %27 = vector.broadcast %c2_i32_5 : i32 to vector<8x256xi32>
    %28 = arith.cmpi eq, %15, %27 : vector<8x256xi32>
    %29 = arith.extui %28 : vector<8x256xi1> to vector<8x256xi32>
    %30 = arith.sitofp %29 : vector<8x256xi32> to vector<8x256xf32>
    %31 = vector.broadcast %8 : vector<1x256xf32> to vector<8x256xf32>
    %32 = arith.mulf %30, %31 : vector<8x256xf32>
    %33 = arith.addf %26, %32 : vector<8x256xf32>
    %c3_i32 = arith.constant 3 : i32
    %34 = vector.broadcast %c3_i32 : i32 to vector<8x256xi32>
    %35 = arith.cmpi eq, %15, %34 : vector<8x256xi32>
    %36 = arith.extui %35 : vector<8x256xi1> to vector<8x256xi32>
    %37 = arith.sitofp %36 : vector<8x256xi32> to vector<8x256xf32>
    %38 = vector.broadcast %13 : vector<1x256xf32> to vector<8x256xf32>
    %39 = arith.mulf %37, %38 : vector<8x256xf32>
    %40 = arith.addf %33, %39 : vector<8x256xf32>
    %41 = arith.truncf %40 : vector<8x256xf32> to vector<8x256xbf16>
    %c0_6 = arith.constant 0 : index
    %c0_7 = arith.constant 0 : index
    %42 = vector.load %arg1[%c0_6, %c0_7] : memref<256x256xbf16, #tpu.memory_space<vmem>>, vector<256x256xbf16>
    %c0_8 = arith.constant 0 : index
    %c0_9 = arith.constant 0 : index
    %43 = vector.load %arg2[%c0_8, %c0_9] : memref<256x256xf32, #tpu.memory_space<vmem>>, vector<256x256xf32>
    %c0_10 = arith.constant 0 : index
    %c0_11 = arith.constant 0 : index
    %44 = vector.load %arg3[%c0_10, %c0_11] : memref<256x256xf32, #tpu.memory_space<vmem>>, vector<256x256xf32>
    %45 = arith.minimumf %43, %44 : vector<256x256xf32>
    %c256_i32 = arith.constant 256 : i32
    %46 = arith.muli %arg0, %c256_i32 : i32
    %47 = tpu.assume_multiple %46, 256 : i32
    %cst = arith.constant dense<0.000000e+00> : vector<8x256xf32>
    %48 = tpu.matmul %41, %42, %cst {dimension_numbers = #tpu.dot_dimension_numbers<[1], [0], [0], [1], [0, 0, 1, 1], [], []>} : vector<8x256xbf16>, vector<256x256xbf16>, vector<8x256xf32> -> vector<8x256xf32>
    %c0_12 = arith.constant 0 : index
    %49 = arith.index_cast %47 : i32 to index
    %50 = vector.load %arg9[%c0_12, %49] : memref<8x256xf32, #tpu.memory_space<vmem>>, vector<8x256xf32>
    tpu.vector_store %arg9[%c0_12, %49], %48 {strides = array<i32>} : memref<8x256xf32, #tpu.memory_space<vmem>>, vector<8x256xf32>,
    %51 = arith.truncf %43 : vector<256x256xf32> to vector<256x256xbf16>
    %52 = arith.extf %51 : vector<256x256xbf16> to vector<256x256xf32>
    %53 = arith.subf %43, %52 : vector<256x256xf32>
    %54 = arith.truncf %53 : vector<256x256xf32> to vector<256x256xbf16>
    %cst_13 = arith.constant dense<0.000000e+00> : vector<8x256xf32>
    %55 = tpu.matmul %41, %51, %cst_13 {dimension_numbers = #tpu.dot_dimension_numbers<[1], [0], [0], [1], [0, 0, 1, 1], [], []>} : vector<8x256xbf16>, vector<256x256xbf16>, vector<8x256xf32> -> vector<8x256xf32>
    %cst_14 = arith.constant dense<0.000000e+00> : vector<8x256xf32>
    %56 = tpu.matmul %41, %54, %cst_14 {dimension_numbers = #tpu.dot_dimension_numbers<[1], [0], [0], [1], [0, 0, 1, 1], [], []>} : vector<8x256xbf16>, vector<256x256xbf16>, vector<8x256xf32> -> vector<8x256xf32>
    %57 = arith.addf %55, %56 : vector<8x256xf32>
    %c0_15 = arith.constant 0 : index
    %58 = arith.index_cast %47 : i32 to index
    %59 = vector.load %arg10[%c0_15, %58] : memref<8x256xf32, #tpu.memory_space<vmem>>, vector<8x256xf32>
    tpu.vector_store %arg10[%c0_15, %58], %57 {strides = array<i32>} : memref<8x256xf32, #tpu.memory_space<vmem>>, vector<8x256xf32>,
    %60 = arith.truncf %44 : vector<256x256xf32> to vector<256x256xbf16>
    %61 = arith.extf %60 : vector<256x256xbf16> to vector<256x256xf32>
    %62 = arith.subf %44, %61 : vector<256x256xf32>
    %63 = arith.truncf %62 : vector<256x256xf32> to vector<256x256xbf16>
    %cst_16 = arith.constant dense<0.000000e+00> : vector<8x256xf32>
    %64 = tpu.matmul %41, %60, %cst_16 {dimension_numbers = #tpu.dot_dimension_numbers<[1], [0], [0], [1], [0, 0, 1, 1], [], []>} : vector<8x256xbf16>, vector<256x256xbf16>, vector<8x256xf32> -> vector<8x256xf32>
    %cst_17 = arith.constant dense<0.000000e+00> : vector<8x256xf32>
    %65 = tpu.matmul %41, %63, %cst_17 {dimension_numbers = #tpu.dot_dimension_numbers<[1], [0], [0], [1], [0, 0, 1, 1], [], []>} : vector<8x256xbf16>, vector<256x256xbf16>, vector<8x256xf32> -> vector<8x256xf32>
    %66 = arith.addf %64, %65 : vector<8x256xf32>
    %c0_18 = arith.constant 0 : index
    %67 = arith.index_cast %47 : i32 to index
    %68 = vector.load %arg11[%c0_18, %67] : memref<8x256xf32, #tpu.memory_space<vmem>>, vector<8x256xf32>
    tpu.vector_store %arg11[%c0_18, %67], %66 {strides = array<i32>} : memref<8x256xf32, #tpu.memory_space<vmem>>, vector<8x256xf32>,
    %69 = arith.truncf %45 : vector<256x256xf32> to vector<256x256xbf16>
    %70 = arith.extf %69 : vector<256x256xbf16> to vector<256x256xf32>
    %71 = arith.subf %45, %70 : vector<256x256xf32>
    %72 = arith.truncf %71 : vector<256x256xf32> to vector<256x256xbf16>
    %cst_19 = arith.constant dense<0.000000e+00> : vector<8x256xf32>
    %73 = tpu.matmul %41, %69, %cst_19 {dimension_numbers = #tpu.dot_dimension_numbers<[1], [0], [0], [1], [0, 0, 1, 1], [], []>} : vector<8x256xbf16>, vector<256x256xbf16>, vector<8x256xf32> -> vector<8x256xf32>
    %cst_20 = arith.constant dense<0.000000e+00> : vector<8x256xf32>
    %74 = tpu.matmul %41, %72, %cst_20 {dimension_numbers = #tpu.dot_dimension_numbers<[1], [0], [0], [1], [0, 0, 1, 1], [], []>} : vector<8x256xbf16>, vector<256x256xbf16>, vector<8x256xf32> -> vector<8x256xf32>
    %75 = arith.addf %73, %74 : vector<8x256xf32>
    %c0_21 = arith.constant 0 : index
    %76 = arith.index_cast %47 : i32 to index
    %77 = vector.load %arg12[%c0_21, %76] : memref<8x256xf32, #tpu.memory_space<vmem>>, vector<8x256xf32>
    tpu.vector_store %arg12[%c0_21, %76], %75 {strides = array<i32>} : memref<8x256xf32, #tpu.memory_space<vmem>>, vector<8x256xf32>,
    %c0_i32_22 = arith.constant 0 : i32
    %78 = arith.cmpi eq, %arg0, %c0_i32_22 : i32
    %79 = arith.extui %78 : i1 to i32
    %cst_23 = arith.constant -1.000000e+30 : f32
    %c0_i32_24 = arith.constant 0 : i32
    %80 = arith.cmpi ne, %79, %c0_i32_24 : i32
    scf.if %80 {
      %c0_25 = arith.constant 0 : index
      %81 = memref.load %arg7[%c0_25] : memref<1xf32, #tpu.memory_space<smem>>
      %c0_26 = arith.constant 0 : index
      %c0_27 = arith.constant 0 : index
      %82 = vector.load %arg6[%c0_26, %c0_27] : memref<1x256xi32, #tpu.memory_space<vmem>>, vector<1x256xi32>
      %c0_28 = arith.constant 0 : index
      %c0_29 = arith.constant 0 : index
      %83 = vector.load %arg9[%c0_28, %c0_29] : memref<8x256xf32, #tpu.memory_space<vmem>>, vector<1x256xf32>
      %c1 = arith.constant 1 : index
      %c0_30 = arith.constant 0 : index
      %84 = vector.load %arg9[%c1, %c0_30] : memref<8x256xf32, #tpu.memory_space<vmem>>, vector<1x256xf32>
      %c0_31 = arith.constant 0 : index
      %c0_32 = arith.constant 0 : index
      %85 = vector.load %arg12[%c0_31, %c0_32] : memref<8x256xf32, #tpu.memory_space<vmem>>, vector<1x256xf32>
      %cst_33 = arith.constant 0.000000e+00 : f32
      %86 = vector.broadcast %cst_33 : f32 to vector<1x256xf32>
      %87 = arith.subf %86, %85 : vector<1x256xf32>
      %c2 = arith.constant 2 : index
      %c0_34 = arith.constant 0 : index
      %88 = vector.load %arg10[%c2, %c0_34] : memref<8x256xf32, #tpu.memory_space<vmem>>, vector<1x256xf32>
      %c3 = arith.constant 3 : index
      %c0_35 = arith.constant 0 : index
      %89 = vector.load %arg11[%c3, %c0_35] : memref<8x256xf32, #tpu.memory_space<vmem>>, vector<1x256xf32>
      %90 = arith.addf %88, %89 : vector<1x256xf32>
      %cst_36 = arith.constant 0.000000e+00 : f32
      %91 = vector.broadcast %cst_36 : f32 to vector<1x256xf32>
      %92 = arith.subf %91, %90 : vector<1x256xf32>
      %c3_37 = arith.constant 3 : index
      %c0_38 = arith.constant 0 : index
      %93 = vector.load %arg10[%c3_37, %c0_38] : memref<8x256xf32, #tpu.memory_space<vmem>>, vector<1x256xf32>
      %c2_39 = arith.constant 2 : index
      %c0_40 = arith.constant 0 : index
      %94 = vector.load %arg11[%c2_39, %c0_40] : memref<8x256xf32, #tpu.memory_space<vmem>>, vector<1x256xf32>
      %95 = arith.addf %93, %94 : vector<1x256xf32>
      %cst_41 = arith.constant 0.000000e+00 : f32
      %96 = vector.broadcast %cst_41 : f32 to vector<1x256xf32>
      %97 = arith.subf %96, %95 : vector<1x256xf32>
      %cst_42 = arith.constant 1.000000e+00 : f32
      %98 = vector.broadcast %cst_42 : f32 to vector<1x256xf32>
      %99 = arith.maximumf %83, %98 : vector<1x256xf32>
      %100 = arith.divf %87, %99 : vector<1x256xf32>
      %cst_43 = arith.constant 0.000000e+00 : f32
      %101 = vector.broadcast %cst_43 : f32 to vector<1x256xf32>
      %102 = arith.cmpf ogt, %14, %101 : vector<1x256xf32>
      %103 = vector.broadcast %cst_23 : f32 to vector<1x256xf32>
      %104 = arith.select %102, %100, %103 : vector<1x256xi1>, vector<1x256xf32>
      %cst_44 = arith.constant dense<0xFF800000> : vector<1xf32>
      %105 = vector.multi_reduction <maximumf>, %104, %cst_44 [1] : vector<1x256xf32> to vector<1xf32>
      %106 = vector.shape_cast %105 : vector<1xf32> to vector<1x1xf32>
      %107 = tpu.iota {dimensions = array<i32: 1>} : vector<1x256xi32>
      %108 = vector.broadcast %106 : vector<1x1xf32> to vector<1x256xf32>
      %109 = arith.cmpf oge, %104, %108 : vector<1x256xf32>
      %c256_i32_45 = arith.constant 256 : i32
      %110 = vector.broadcast %c256_i32_45 : i32 to vector<1x256xi32>
      %111 = arith.select %109, %107, %110 : vector<1x256xi1>, vector<1x256xi32>
      %cst_46 = arith.constant dense<2147483647> : vector<1xi32>
      %112 = vector.multi_reduction <minsi>, %111, %cst_46 [1] : vector<1x256xi32> to vector<1xi32>
      %113 = vector.shape_cast %112 : vector<1xi32> to vector<1x1xi32>
      %114 = vector.broadcast %113 : vector<1x1xi32> to vector<1x256xi32>
      %115 = arith.cmpi eq, %107, %114 : vector<1x256xi32>
      %c0_i32_47 = arith.constant 0 : i32
      %116 = vector.broadcast %c0_i32_47 : i32 to vector<1x256xi32>
      %117 = arith.select %115, %82, %116 : vector<1x256xi1>, vector<1x256xi32>
      %cst_48 = arith.constant dense<0> : vector<1xi32>
      %118 = vector.multi_reduction <add>, %117, %cst_48 [1] : vector<1x256xi32> to vector<1xi32>
      %119 = vector.shape_cast %118 : vector<1xi32> to vector<1x1xi32>
      %120 = vector.broadcast %119 : vector<1x1xi32> to vector<1x256xi32>
      %121 = arith.cmpi eq, %82, %120 : vector<1x256xi32>
      %cst_49 = arith.constant 0.000000e+00 : f32
      %122 = vector.broadcast %cst_49 : f32 to vector<1x256xf32>
      %123 = arith.cmpf ogt, %84, %122 : vector<1x256xf32>
      %cst_50 = arith.constant 1.000000e+00 : f32
      %124 = vector.broadcast %cst_50 : f32 to vector<1x256xf32>
      %125 = arith.maximumf %84, %124 : vector<1x256xf32>
      %cst_51 = arith.constant 1.000000e+00 : f32
      %126 = vector.broadcast %cst_51 : f32 to vector<1x256xf32>
      %127 = arith.divf %126, %125 : vector<1x256xf32>
      %128 = arith.mulf %92, %127 : vector<1x256xf32>
      %129 = vector.broadcast %cst_23 : f32 to vector<1x256xf32>
      %130 = arith.select %123, %128, %129 : vector<1x256xi1>, vector<1x256xf32>
      %131 = arith.mulf %97, %127 : vector<1x256xf32>
      %132 = vector.broadcast %cst_23 : f32 to vector<1x256xf32>
      %133 = arith.select %123, %131, %132 : vector<1x256xi1>, vector<1x256xf32>
      %134 = arith.cmpf oge, %130, %133 : vector<1x256xf32>
      %c1_i32_52 = arith.constant 1 : i32
      %c2_i32_53 = arith.constant 2 : i32
      %135 = vector.broadcast %c1_i32_52 : i32 to vector<1x256xi32>
      %136 = vector.broadcast %c2_i32_53 : i32 to vector<1x256xi32>
      %137 = arith.select %134, %135, %136 : vector<1x256xi1>, vector<1x256xi32>
      %138 = arith.maximumf %130, %133 : vector<1x256xf32>
      %139 = vector.broadcast %81 : f32 to vector<1x256xf32>
      %140 = arith.cmpf oge, %138, %139 : vector<1x256xf32>
      %c0_i32_54 = arith.constant 0 : i32
      %141 = vector.broadcast %c0_i32_54 : i32 to vector<1x256xi32>
      %142 = arith.select %140, %137, %141 : vector<1x256xi1>, vector<1x256xi32>
      %c-1_i32 = arith.constant -1 : i32
      %143 = vector.broadcast %c-1_i32 : i32 to vector<1x256xi32>
      %144 = arith.select %121, %142, %143 : vector<1x256xi1>, vector<1x256xi32>
      %145 = arith.select %3, %0, %144 : vector<1x256xi1>, vector<1x256xi32>
      %c0_55 = arith.constant 0 : index
      %c0_56 = arith.constant 0 : index
      %146 = vector.load %arg8[%c0_55, %c0_56] : memref<1x256xi32, #tpu.memory_space<vmem>>, vector<1x256xi32>
      tpu.vector_store %arg8[%c0_55, %c0_56], %145 {strides = array<i32>} : memref<1x256xi32, #tpu.memory_space<vmem>>, vector<1x256xi32>,
    } else {
    }
    return
  }
  func.func @transform_0(%arg0: i32) -> (i32, i32) {
    %c0_i32 = arith.constant 0 : i32
    %c0_i32_0 = arith.constant 0 : i32
    return %c0_i32, %arg0 : i32, i32
  }
  func.func @transform_1(%arg0: i32) -> (i32, i32) {
    %c0_i32 = arith.constant 0 : i32
    %c0_i32_0 = arith.constant 0 : i32
    return %c0_i32, %arg0 : i32, i32
  }
  func.func @transform_2(%arg0: i32) -> (i32, i32) {
    %c0_i32 = arith.constant 0 : i32
    %c0_i32_0 = arith.constant 0 : i32
    return %c0_i32, %arg0 : i32, i32
  }
  func.func @transform_3(%arg0: i32) -> (i32, i32) {
    %c0_i32 = arith.constant 0 : i32
    %c0_i32_0 = arith.constant 0 : i32
    %c0_i32_1 = arith.constant 0 : i32
    return %c0_i32, %c0_i32_0 : i32, i32
  }
  func.func @transform_4(%arg0: i32) -> (i32, i32) {
    %c0_i32 = arith.constant 0 : i32
    %c0_i32_0 = arith.constant 0 : i32
    %c0_i32_1 = arith.constant 0 : i32
    return %c0_i32, %c0_i32_0 : i32, i32
  }
  func.func @transform_5(%arg0: i32) -> (i32, i32) {
    %c0_i32 = arith.constant 0 : i32
    %c0_i32_0 = arith.constant 0 : i32
    %c0_i32_1 = arith.constant 0 : i32
    return %c0_i32, %c0_i32_0 : i32, i32
  }
  func.func @transform_6(%arg0: i32) -> i32 {
    %c0_i32 = arith.constant 0 : i32
    %c0_i32_0 = arith.constant 0 : i32
    return %c0_i32 : i32
  }
  func.func @transform_7(%arg0: i32) -> (i32, i32) {
    %c0_i32 = arith.constant 0 : i32
    %c0_i32_0 = arith.constant 0 : i32
    %c0_i32_1 = arith.constant 0 : i32
    return %c0_i32, %c0_i32_0 : i32, i32
  }
}

</mosaic_0001>

<llo_original>
// kernel: tpu_custom_call.1
$region0: #{tpu_custom_call.1}
  #allocation0 [shape = 'u32[]', space=smem, size = 0x4, offset = 0x4, fixed_abs, tag = 'smem constant byte address 0x4 - core index']
  #allocation1 [shape = 'u32[144,128]{1,0:T(1,128)}', space=vmem, size = 0x12000, scoped, tag = 'internal scratch']
  #allocation2 [shape = 'f32[8,256]{1,0:T(8,128)}', space=vmem, size = 0x2000, scoped, tag = 'scratch operand']
  #allocation3 [shape = 'f32[8,256]{1,0:T(8,128)}', space=vmem, size = 0x2000, scoped, tag = 'scratch operand']
  #allocation4 [shape = 'f32[8,256]{1,0:T(8,128)}', space=vmem, size = 0x2000, scoped, tag = 'scratch operand']
  #allocation5 [shape = 'f32[8,256]{1,0:T(8,128)}', space=vmem, size = 0x2000, scoped, tag = 'scratch operand']
  #allocation6 [shape = 'f32[1]{0:T(128)S(6)}', space=smem, size = 0x200, scoped, tag = 'scoped memory for tpu_custom_call.1']
  %s0 = inlined_call_operand.hbm [shape: bf16[256,256], index: 0, kind: input, shape index: {}]
  %s1 = inlined_call_operand.hbm [shape: f32[256,256], index: 1, kind: input, shape index: {}]
  %s2 = inlined_call_operand.hbm [shape: f32[256,256], index: 2, kind: input, shape index: {}]
  %s3 = inlined_call_operand.vmem [shape: s32[1,256], index: 3, kind: input, shape index: {}]
  %s4 = inlined_call_operand.vmem [shape: s32[1,256], index: 4, kind: input, shape index: {}]
  %s5 = inlined_call_operand.vmem [shape: s32[1,256], index: 5, kind: input, shape index: {}]
  %s6 = inlined_call_operand.<no memory space> [shape: f32[1], index: 6, kind: input, shape index: {}]
  %s7 = inlined_call_operand.hbm [shape: s32[1,256], index: 7, kind: output, shape index: {}]
  %s8 = sld [smem:[#allocation0]]
  $region54: #{tpu_custom_call.1} parent=0
    _
  %s10 = ssub.s32 1, %s8
  %s11 = scalar_select 0, %s10, %s8
  %12 = sst [smem:[#allocation6]] %s6
  $region1: #{tpu_custom_call.1} parent=0
    #allocation7 [shape = 'u8[131072]{0}', space=vmem, size = 0x20000, scoped, tag = 'input window, operand 0, single buffered']
    #allocation8 [shape = 's32[1]{0}', space=sflag, size = 0x4, scoped, tag = 'scoped memory for tpu_custom_call.1']
    #allocation9 [shape = 's32[1]{0}', space=sflag, size = 0x4, scoped, tag = 'scoped memory for tpu_custom_call.1']
    #allocation10 [shape = 'u8[262144]{0}', space=vmem, size = 0x40000, scoped, tag = 'input window, operand 1, single buffered']
    #allocation11 [shape = 's32[1]{0}', space=sflag, size = 0x4, scoped, tag = 'scoped memory for tpu_custom_call.1']
    #allocation12 [shape = 'u8[262144]{0}', space=vmem, size = 0x40000, scoped, tag = 'input window, operand 2, single buffered']
    #allocation13 [shape = 'u8[1024]{0}', space=vmem, size = 0x400, scoped, tag = 'output window, operand 0, single buffered']
    %13 = vsyncpa [#allocation8], 0
    %14 = vsyncpa [#allocation11], 0
    %15 = vsyncpa [#allocation9], 0
    // Predicated region
    $region2: #{tpu_custom_call.1} parent=1 // pred_check
      _
    $region3: #{tpu_custom_call.1} parent=1 // pred_check_branch
      %17 = sbr.rel (0) target = $region5
    $region4: #{tpu_custom_call.1} parent=1 // pred_region
      %s19 = ssub.s32 4096, 4096
      %20 = vsyncadd [#allocation8], %s19
      %s21 = sshll.u32 [#allocation7], 4
      %s22 = int_to_ptr.vmem [resolvable:$true] %s21
      %27 = dma.hbm_to_vmem [thread:$0]  %s0, 4096, %s22, [#allocation8], 128, 128, 8
    $region5: #{tpu_custom_call.1} parent=1 // pred_fallthru
      _
    // Predicated region
    $region6: #{tpu_custom_call.1} parent=1 // pred_check
      _
    $region7: #{tpu_custom_call.1} parent=1 // pred_check_branch
      %29 = sbr.rel (0) target = $region9
    $region8: #{tpu_custom_call.1} parent=1 // pred_region
      %s31 = ssub.s32 8192, 8192
      %32 = vsyncadd [#allocation11], %s31
      %s33 = sshll.u32 [#allocation10], 4
      %s34 = int_to_ptr.vmem [resolvable:$true] %s33
      %39 = dma.hbm_to_vmem [thread:$0]  %s1, 8192, %s34, [#allocation11], 256, 256, 16
    $region9: #{tpu_custom_call.1} parent=1 // pred_fallthru
      _
    // Predicated region
    $region10: #{tpu_custom_call.1} parent=1 // pred_check
      _
    $region11: #{tpu_custom_call.1} parent=1 // pred_check_branch
      %41 = sbr.rel (0) target = $region13
    $region12: #{tpu_custom_call.1} parent=1 // pred_region
      %s43 = ssub.s32 8192, 8192
      %44 = vsyncadd [#allocation11], %s43
      %s45 = sshll.u32 [#allocation12], 4
      %s46 = int_to_ptr.vmem [resolvable:$true] %s45
      %51 = dma.hbm_to_vmem [thread:$0]  %s2, 8192, %s46, [#allocation11], 256, 256, 16
    $region13: #{tpu_custom_call.1} parent=1 // pred_fallthru
      _
    // Predicated region
    $region14: #{tpu_custom_call.1} parent=1 // pred_check
      _
    $region15: #{tpu_custom_call.1} parent=1 // pred_check_branch
      %53 = sbr.rel (0) target = $region17
    $region16: #{tpu_custom_call.1} parent=1 // pred_region
      _
    $region17: #{tpu_custom_call.1} parent=1 // pred_fallthru
      _
    // Predicated region
    $region18: #{tpu_custom_call.1} parent=1 // pred_check
      _
    $region19: #{tpu_custom_call.1} parent=1 // pred_check_branch
      %55 = sbr.rel (0) target = $region21
    $region20: #{tpu_custom_call.1} parent=1 // pred_region
      _
    $region21: #{tpu_custom_call.1} parent=1 // pred_fallthru
      _
    // Predicated region
    $region22: #{tpu_custom_call.1} parent=1 // pred_check
      _
    $region23: #{tpu_custom_call.1} parent=1 // pred_check_branch
      %57 = sbr.rel (0) target = $region25
    $region24: #{tpu_custom_call.1} parent=1 // pred_region
      _
    $region25: #{tpu_custom_call.1} parent=1 // pred_fallthru
      _
    // Predicated region
    $region26: #{tpu_custom_call.1} parent=1 // pred_check
      _
    $region27: #{tpu_custom_call.1} parent=1 // pred_check_branch
      %59 = sbr.rel (0) target = $region29
    $region28: #{tpu_custom_call.1} parent=1 // pred_region
      _
    $region29: #{tpu_custom_call.1} parent=1 // pred_fallthru
      _
    // Predicated region
    $region30: #{tpu_custom_call.1} parent=1 // pred_check
      _
    $region31: #{tpu_custom_call.1} parent=1 // pred_check_branch
      %61 = sbr.rel (0) target = $region33
    $region32: #{tpu_custom_call.1} parent=1 // pred_region
      %62 = dma.done [#allocation8], 4096
    $region33: #{tpu_custom_call.1} parent=1 // pred_fallthru
      _
    // Predicated region
    $region34: #{tpu_custom_call.1} parent=1 // pred_check
      _
    $region35: #{tpu_custom_call.1} parent=1 // pred_check_branch
      %64 = sbr.rel (0) target = $region37
    $region36: #{tpu_custom_call.1} parent=1 // pred_region
      %65 = dma.done [#allocation11], 8192
    $region37: #{tpu_custom_call.1} parent=1 // pred_fallthru
      _
    // Predicated region
    $region38: #{tpu_custom_call.1} parent=1 // pred_check
      _
    $region39: #{tpu_custom_call.1} parent=1 // pred_check_branch
      %67 = sbr.rel (0) target = $region41
    $region40: #{tpu_custom_call.1} parent=1 // pred_region
      %68 = dma.done [#allocation11], 8192
    $region41: #{tpu_custom_call.1} parent=1 // pred_fallthru
      _
    %v69 = vld [vmem:[%s3] sm:$0x3]
    %v70 = vld [vmem:[%s4] sm:$0x3]
    %vm71 = vcmp.gt.s32.totalorder %v70, 0
    %vm72 = vcmp.eq.s32.totalorder %v69, 1
    %vm73 = vmand %vm71, %vm72
    %v74 = vsel %vm73, 1, 0
    %v75 = vcvt.s32.f32 %v74
    %vm76 = vcmp.eq.s32.totalorder %v69, 2
    %vm77 = vmand %vm71, %vm76
    %v78 = vsel %vm77, 1, 0
    %v79 = vcvt.s32.f32 %v78
    %v80 = vadd.f32 %v75, %v79
    %v81 = vlaneseq
    %v82 = vshrl.u32 %v81, 7
    %vm83 = vcmp.eq.s32.totalorder %v82, 0
    %v84 = vsel %vm83, 1, 0
    %v85 = vcvt.s32.f32 %v84
    %vm86 = vcmp.eq.s32.totalorder %v82, 1
    %v87 = vsel %vm86, 1, 0
    %v88 = vcvt.s32.f32 %v87
    %v90 = vlaneseq
    %v91 = vshrl.u32 %v90, 7
    %v92 = vsub.s32 0, %v91
    %v93 = vrot.slane %v80, %v92
    %v94 = vlaneseq
    %v95 = vshrl.u32 %v94, 7
    %v96 = vsub.s32 1, %v95
    %v97 = vrot.slane %v80, %v96
    %v100 = vmul.f32 %v88, %v93
    %v101 = vmul.f32 %v88, %v97
    %v102 = vadd.f32 %v85, %v100
    %v103 = vadd.f32 %v85, %v101
    %vm104 = vcmp.eq.s32.totalorder %v82, 2
    %v105 = vsel %vm104, 1, 0
    %v106 = vcvt.s32.f32 %v105
    %v108 = vlaneseq
    %v109 = vshrl.u32 %v108, 7
    %v110 = vsub.s32 0, %v109
    %v111 = vrot.slane %v75, %v110
    %v112 = vlaneseq
    %v113 = vshrl.u32 %v112, 7
    %v114 = vsub.s32 1, %v113
    %v115 = vrot.slane %v75, %v114
    %v118 = vmul.f32 %v106, %v111
    %v119 = vmul.f32 %v106, %v115
    %v120 = vadd.f32 %v102, %v118
    %v121 = vadd.f32 %v103, %v119
    %vm122 = vcmp.eq.s32.totalorder %v82, 3
    %v123 = vsel %vm122, 1, 0
    %v124 = vcvt.s32.f32 %v123
    %v126 = vlaneseq
    %v127 = vshrl.u32 %v126, 7
    %v128 = vsub.s32 0, %v127
    %v129 = vrot.slane %v79, %v128
    %v130 = vlaneseq
    %v131 = vshrl.u32 %v130, 7
    %v132 = vsub.s32 1, %v131
    %v133 = vrot.slane %v79, %v132
    %v136 = vmul.f32 %v124, %v129
    %v137 = vmul.f32 %v124, %v133
    %v138 = vadd.f32 %v120, %v136
    %v139 = vadd.f32 %v121, %v137
    %v140 = vpack.c.bf16 %v138, %v138
    %v141 = vpack.c.bf16 %v139, %v139
    %v142 = vld [vmem:[#allocation7] sm:$0xff]
    %v143 = vld [vmem:[#allocation7 + $0x8] sm:$0xff]
    %v144 = vld [vmem:[#allocation7 + $0x10] sm:$0xff]
    %v145 = vld [vmem:[#allocation7 + $0x18] sm:$0xff]
    %v146 = vld [vmem:[#allocation7 + $0x20] sm:$0xff]
    %v147 = vld [vmem:[#allocation7 + $0x28] sm:$0xff]
    %v148 = vld [vmem:[#allocation7 + $0x30] sm:$0xff]
    %v149 = vld [vmem:[#allocation7 + $0x38] sm:$0xff]
    %v150 = vld [vmem:[#allocation7 + $0x40] sm:$0xff]
    %v151 = vld [vmem:[#allocation7 + $0x48] sm:$0xff]
    %v152 = vld [vmem:[#allocation7 + $0x50] sm:$0xff]
    %v153 = vld [vmem:[#allocation7 + $0x58] sm:$0xff]
    %v154 = vld [vmem:[#allocation7 + $0x60] sm:$0xff]
    %v155 = vld [vmem:[#allocation7 + $0x68] sm:$0xff]
    %v156 = vld [vmem:[#allocation7 + $0x70] sm:$0xff]
    %v157 = vld [vmem:[#allocation7 + $0x78] sm:$0xff]
    %v158 = vld [vmem:[#allocation7 + $0x80] sm:$0xff]
    %v159 = vld [vmem:[#allocation7 + $0x88] sm:$0xff]
    %v160 = vld [vmem:[#allocation7 + $0x90] sm:$0xff]
    %v161 = vld [vmem:[#allocation7 + $0x98] sm:$0xff]
    %v162 = vld [vmem:[#allocation7 + $0xa0] sm:$0xff]
    %v163 = vld [vmem:[#allocation7 + $0xa8] sm:$0xff]
    %v164 = vld [vmem:[#allocation7 + $0xb0] sm:$0xff]
    %v165 = vld [vmem:[#allocation7 + $0xb8] sm:$0xff]
    %v166 = vld [vmem:[#allocation7 + $0xc0] sm:$0xff]
    %v167 = vld [vmem:[#allocation7 + $0xc8] sm:$0xff]
    %v168 = vld [vmem:[#allocation7 + $0xd0] sm:$0xff]
    %v169 = vld [vmem:[#allocation7 + $0xd8] sm:$0xff]
    %v170 = vld [vmem:[#allocation7 + $0xe0] sm:$0xff]
    %v171 = vld [vmem:[#allocation7 + $0xe8] sm:$0xff]
    %v172 = vld [vmem:[#allocation7 + $0xf0] sm:$0xff]
    %v173 = vld [vmem:[#allocation7 + $0xf8] sm:$0xff]
    %v174 = vld [vmem:[#allocation10] sm:$0xff]
    %v175 = vld [vmem:[#allocation10 + $0x8] sm:$0xff]
    %v176 = vld [vmem:[#allocation10 + $0x10] sm:$0xff]
    %v177 = vld [vmem:[#allocation10 + $0x18] sm:$0xff]
    %v178 = vld [vmem:[#allocation10 + $0x20] sm:$0xff]
    %v179 = vld [vmem:[#allocation10 + $0x28] sm:$0xff]
    %v180 = vld [vmem:[#allocation10 + $0x30] sm:$0xff]
    %v181 = vld [vmem:[#allocation10 + $0x38] sm:$0xff]
    %v182 = vld [vmem:[#allocation10 + $0x40] sm:$0xff]
    %v183 = vld [vmem:[#allocation10 + $0x48] sm:$0xff]
    %v184 = vld [vmem:[#allocation10 + $0x50] sm:$0xff]
    %v185 = vld [vmem:[#allocation10 + $0x58] sm:$0xff]
    %v186 = vld [vmem:[#allocation10 + $0x60] sm:$0xff]
    %v187 = vld [vmem:[#allocation10 + $0x68] sm:$0xff]
    %v188 = vld [vmem:[#allocation10 + $0x70] sm:$0xff]
    %v189 = vld [vmem:[#allocation10 + $0x78] sm:$0xff]
    %v190 = vld [vmem:[#allocation10 + $0x80] sm:$0xff]
    %v191 = vld [vmem:[#allocation10 + $0x88] sm:$0xff]
    %v192 = vld [vmem:[#allocation10 + $0x90] sm:$0xff]
    %v193 = vld [vmem:[#allocation10 + $0x98] sm:$0xff]
    %v194 = vld [vmem:[#allocation10 + $0xa0] sm:$0xff]
    %v195 = vld [vmem:[#allocation10 + $0xa8] sm:$0xff]
    %v196 = vld [vmem:[#allocation10 + $0xb0] sm:$0xff]
    %v197 = vld [vmem:[#allocation10 + $0xb8] sm:$0xff]
    %v198 = vld [vmem:[#allocation10 + $0xc0] sm:$0xff]
    %v199 = vld [vmem:[#allocation10 + $0xc8] sm:$0xff]
    %v200 = vld [vmem:[#allocation10 + $0xd0] sm:$0xff]
    %v201 = vld [vmem:[#allocation10 + $0xd8] sm:$0xff]
    %v202 = vld [vmem:[#allocation10 + $0xe0] sm:$0xff]
    %v203 = vld [vmem:[#allocation10 + $0xe8] sm:$0xff]
    %v204 = vld [vmem:[#allocation10 + $0xf0] sm:$0xff]
    %v205 = vld [vmem:[#allocation10 + $0xf8] sm:$0xff]
    %v206 = vld [vmem:[#allocation10 + $0x100] sm:$0xff]
    %v207 = vld [vmem:[#allocation10 + $0x108] sm:$0xff]
    %v208 = vld [vmem:[#allocation10 + $0x110] sm:$0xff]
    %v209 = vld [vmem:[#allocation10 + $0x118] sm:$0xff]
    %v210 = vld [vmem:[#allocation10 + $0x120] sm:$0xff]
    %v211 = vld [vmem:[#allocation10 + $0x128] sm:$0xff]
    %v212 = vld [vmem:[#allocation10 + $0x130] sm:$0xff]
    %v213 = vld [vmem:[#allocation10 + $0x138] sm:$0xff]
    %v214 = vld [vmem:[#allocation10 + $0x140] sm:$0xff]
    %v215 = vld [vmem:[#allocation10 + $0x148] sm:$0xff]
    %v216 = vld [vmem:[#allocation10 + $0x150] sm:$0xff]
    %v217 = vld [vmem:[#allocation10 + $0x158] sm:$0xff]
    %v218 = vld [vmem:[#allocation10 + $0x160] sm:$0xff]
    %v219 = vld [vmem:[#allocation10 + $0x168] sm:$0xff]
    %v220 = vld [vmem:[#allocation10 + $0x170] sm:$0xff]
    %v221 = vld [vmem:[#allocation10 + $0x178] sm:$0xff]
    %v222 = vld [vmem:[#allocation10 + $0x180] sm:$0xff]
    %v223 = vld [vmem:[#allocation10 + $0x188] sm:$0xff]
    %v224 = vld [vmem:[#allocation10 + $0x190] sm:$0xff]
    %v225 = vld [vmem:[#allocation10 + $0x198] sm:$0xff]
    %v226 = vld [vmem:[#allocation10 + $0x1a0] sm:$0xff]
    %v227 = vld [vmem:[#allocation10 + $0x1a8] sm:$0xff]
    %v228 = vld [vmem:[#allocation10 + $0x1b0] sm:$0xff]
    %v229 = vld [vmem:[#allocation10 + $0x1b8] sm:$0xff]
    %v230 = vld [vmem:[#allocation10 + $0x1c0] sm:$0xff]
    %v231 = vld [vmem:[#allocation10 + $0x1c8] sm:$0xff]
    %v232 = vld [vmem:[#allocation10 + $0x1d0] sm:$0xff]
    %v233 = vld [vmem:[#allocation10 + $0x1d8] sm:$0xff]
    %v234 = vld [vmem:[#allocation10 + $0x1e0] sm:$0xff]
    %v235 = vld [vmem:[#allocation10 + $0x1e8] sm:$0xff]
    %v236 = vld [vmem:[#allocation10 + $0x1f0] sm:$0xff]
    %v237 = vld [vmem:[#allocation10 + $0x1f8] sm:$0xff]
    %v238 = vld [vmem:[#allocation12] sm:$0xff]
    %v239 = vld [vmem:[#allocation12 + $0x8] sm:$0xff]
    %v240 = vld [vmem:[#allocation12 + $0x10] sm:$0xff]
    %v241 = vld [vmem:[#allocation12 + $0x18] sm:$0xff]
    %v242 = vld [vmem:[#allocation12 + $0x20] sm:$0xff]
    %v243 = vld [vmem:[#allocation12 + $0x28] sm:$0xff]
    %v244 = vld [vmem:[#allocation12 + $0x30] sm:$0xff]
    %v245 = vld [vmem:[#allocation12 + $0x38] sm:$0xff]
    %v246 = vld [vmem:[#allocation12 + $0x40] sm:$0xff]
    %v247 = vld [vmem:[#allocation12 + $0x48] sm:$0xff]
    %v248 = vld [vmem:[#allocation12 + $0x50] sm:$0xff]
    %v249 = vld [vmem:[#allocation12 + $0x58] sm:$0xff]
    %v250 = vld [vmem:[#allocation12 + $0x60] sm:$0xff]
    %v251 = vld [vmem:[#allocation12 + $0x68] sm:$0xff]
    %v252 = vld [vmem:[#allocation12 + $0x70] sm:$0xff]
    %v253 = vld [vmem:[#allocation12 + $0x78] sm:$0xff]
    %v254 = vld [vmem:[#allocation12 + $0x80] sm:$0xff]
    %v255 = vld [vmem:[#allocation12 + $0x88] sm:$0xff]
    %v256 = vld [vmem:[#allocation12 + $0x90] sm:$0xff]
    %v257 = vld [vmem:[#allocation12 + $0x98] sm:$0xff]
    %v258 = vld [vmem:[#allocation12 + $0xa0] sm:$0xff]
    %v259 = vld [vmem:[#allocation12 + $0xa8] sm:$0xff]
    %v260 = vld [vmem:[#allocation12 + $0xb0] sm:$0xff]
    %v261 = vld [vmem:[#allocation12 + $0xb8] sm:$0xff]
    %v262 = vld [vmem:[#allocation12 + $0xc0] sm:$0xff]
    %v263 = vld [vmem:[#allocation12 + $0xc8] sm:$0xff]
    %v264 = vld [vmem:[#allocation12 + $0xd0] sm:$0xff]
    %v265 = vld [vmem:[#allocation12 + $0xd8] sm:$0xff]
    %v266 = vld [vmem:[#allocation12 + $0xe0] sm:$0xff]
    %v267 = vld [vmem:[#allocation12 + $0xe8] sm:$0xff]
    %v268 = vld [vmem:[#allocation12 + $0xf0] sm:$0xff]
    %v269 = vld [vmem:[#allocation12 + $0xf8] sm:$0xff]
    %v270 = vld [vmem:[#allocation12 + $0x100] sm:$0xff]
    %v271 = vld [vmem:[#allocation12 + $0x108] sm:$0xff]
    %v272 = vld [vmem:[#allocation12 + $0x110] sm:$0xff]
    %v273 = vld [vmem:[#allocation12 + $0x118] sm:$0xff]
    %v274 = vld [vmem:[#allocation12 + $0x120] sm:$0xff]
    %v275 = vld [vmem:[#allocation12 + $0x128] sm:$0xff]
    %v276 = vld [vmem:[#allocation12 + $0x130] sm:$0xff]
    %v277 = vld [vmem:[#allocation12 + $0x138] sm:$0xff]
    %v278 = vld [vmem:[#allocation12 + $0x140] sm:$0xff]
    %v279 = vld [vmem:[#allocation12 + $0x148] sm:$0xff]
    %v280 = vld [vmem:[#allocation12 + $0x150] sm:$0xff]
    %v281 = vld [vmem:[#allocation12 + $0x158] sm:$0xff]
    %v282 = vld [vmem:[#allocation12 + $0x160] sm:$0xff]
    %v283 = vld [vmem:[#allocation12 + $0x168] sm:$0xff]
    %v284 = vld [vmem:[#allocation12 + $0x170] sm:$0xff]
    %v285 = vld [vmem:[#allocation12 + $0x178] sm:$0xff]
    %v286 = vld [vmem:[#allocation12 + $0x180] sm:$0xff]
    %v287 = vld [vmem:[#allocation12 + $0x188] sm:$0xff]
    %v288 = vld [vmem:[#allocation12 + $0x190] sm:$0xff]
    %v289 = vld [vmem:[#allocation12 + $0x198] sm:$0xff]
    %v290 = vld [vmem:[#allocation12 + $0x1a0] sm:$0xff]
    %v291 = vld [vmem:[#allocation12 + $0x1a8] sm:$0xff]
    %v292 = vld [vmem:[#allocation12 + $0x1b0] sm:$0xff]
    %v293 = vld [vmem:[#allocation12 + $0x1b8] sm:$0xff]
    %v294 = vld [vmem:[#allocation12 + $0x1c0] sm:$0xff]
    %v295 = vld [vmem:[#allocation12 + $0x1c8] sm:$0xff]
    %v296 = vld [vmem:[#allocation12 + $0x1d0] sm:$0xff]
    %v297 = vld [vmem:[#allocation12 + $0x1d8] sm:$0xff]
    %v298 = vld [vmem:[#allocation12 + $0x1e0] sm:$0xff]
    %v299 = vld [vmem:[#allocation12 + $0x1e8] sm:$0xff]
    %v300 = vld [vmem:[#allocation12 + $0x1f0] sm:$0xff]
    %v301 = vld [vmem:[#allocation12 + $0x1f8] sm:$0xff]
    %v302 = vmin.f32 %v174, %v238
    %v303 = vmin.f32 %v175, %v239
    %v304 = vmin.f32 %v176, %v240
    %v305 = vmin.f32 %v177, %v241
    %v306 = vmin.f32 %v178, %v242
    %v307 = vmin.f32 %v179, %v243
    %v308 = vmin.f32 %v180, %v244
    %v309 = vmin.f32 %v181, %v245
    %v310 = vmin.f32 %v182, %v246
    %v311 = vmin.f32 %v183, %v247
    %v312 = vmin.f32 %v184, %v248
    %v313 = vmin.f32 %v185, %v249
    %v314 = vmin.f32 %v186, %v250
    %v315 = vmin.f32 %v187, %v251
    %v316 = vmin.f32 %v188, %v252
    %v317 = vmin.f32 %v189, %v253
    %v318 = vmin.f32 %v190, %v254
    %v319 = vmin.f32 %v191, %v255
    %v320 = vmin.f32 %v192, %v256
    %v321 = vmin.f32 %v193, %v257
    %v322 = vmin.f32 %v194, %v258
    %v323 = vmin.f32 %v195, %v259
    %v324 = vmin.f32 %v196, %v260
    %v325 = vmin.f32 %v197, %v261
    %v326 = vmin.f32 %v198, %v262
    %v327 = vmin.f32 %v199, %v263
    %v328 = vmin.f32 %v200, %v264
    %v329 = vmin.f32 %v201, %v265
    %v330 = vmin.f32 %v202, %v266
    %v331 = vmin.f32 %v203, %v267
    %v332 = vmin.f32 %v204, %v268
    %v333 = vmin.f32 %v205, %v269
    %v334 = vmin.f32 %v206, %v270
    %v335 = vmin.f32 %v207, %v271
    %v336 = vmin.f32 %v208, %v272
    %v337 = vmin.f32 %v209, %v273
    %v338 = vmin.f32 %v210, %v274
    %v339 = vmin.f32 %v211, %v275
    %v340 = vmin.f32 %v212, %v276
    %v341 = vmin.f32 %v213, %v277
    %v342 = vmin.f32 %v214, %v278
    %v343 = vmin.f32 %v215, %v279
    %v344 = vmin.f32 %v216, %v280
    %v345 = vmin.f32 %v217, %v281
    %v346 = vmin.f32 %v218, %v282
    %v347 = vmin.f32 %v219, %v283
    %v348 = vmin.f32 %v220, %v284
    %v349 = vmin.f32 %v221, %v285
    %v350 = vmin.f32 %v222, %v286
    %v351 = vmin.f32 %v223, %v287
    %v352 = vmin.f32 %v224, %v288
    %v353 = vmin.f32 %v225, %v289
    %v354 = vmin.f32 %v226, %v290
    %v355 = vmin.f32 %v227, %v291
    %v356 = vmin.f32 %v228, %v292
    %v357 = vmin.f32 %v229, %v293
    %v358 = vmin.f32 %v230, %v294
    %v359 = vmin.f32 %v231, %v295
    %v360 = vmin.f32 %v232, %v296
    %v361 = vmin.f32 %v233, %v297
    %v362 = vmin.f32 %v234, %v298
    %v363 = vmin.f32 %v235, %v299
    %v364 = vmin.f32 %v236, %v300
    %v365 = vmin.f32 %v237, %v301
    %s366 = smul.u32 0, 256
    %v399 = vunpack.c.l.b16 %v142
    %v400 = vunpack.c.h.b16 %v142
    %v401 = vunpack.c.l.b16 %v143
    %v402 = vunpack.c.h.b16 %v143
    %v403 = vunpack.c.l.b16 %v144
    %v404 = vunpack.c.h.b16 %v144
    %v405 = vunpack.c.l.b16 %v145
    %v406 = vunpack.c.h.b16 %v145
    %v407 = vunpack.c.l.b16 %v146
    %v408 = vunpack.c.h.b16 %v146
    %v409 = vunpack.c.l.b16 %v147
    %v410 = vunpack.c.h.b16 %v147
    %v411 = vunpack.c.l.b16 %v148
    %v412 = vunpack.c.h.b16 %v148
    %v413 = vunpack.c.l.b16 %v149
    %v414 = vunpack.c.h.b16 %v149
    %v415 = vunpack.c.l.b16 %v150
    %v416 = vunpack.c.h.b16 %v150
    %v417 = vunpack.c.l.b16 %v151
    %v418 = vunpack.c.h.b16 %v151
    %v419 = vunpack.c.l.b16 %v152
    %v420 = vunpack.c.h.b16 %v152
    %v421 = vunpack.c.l.b16 %v153
    %v422 = vunpack.c.h.b16 %v153
    %v423 = vunpack.c.l.b16 %v154
    %v424 = vunpack.c.h.b16 %v154
    %v425 = vunpack.c.l.b16 %v155
    %v426 = vunpack.c.h.b16 %v155
    %v427 = vunpack.c.l.b16 %v156
    %v428 = vunpack.c.h.b16 %v156
    %v429 = vunpack.c.l.b16 %v157
    %v430 = vunpack.c.h.b16 %v157
    %v431 = vunpack.c.l.b16 %v158
    %v432 = vunpack.c.h.b16 %v158
    %v433 = vunpack.c.l.b16 %v159
    %v434 = vunpack.c.h.b16 %v159
    %v435 = vunpack.c.l.b16 %v160
    %v436 = vunpack.c.h.b16 %v160
    %v437 = vunpack.c.l.b16 %v161
    %v438 = vunpack.c.h.b16 %v161
    %v439 = vunpack.c.l.b16 %v162
    %v440 = vunpack.c.h.b16 %v162
    %v441 = vunpack.c.l.b16 %v163
    %v442 = vunpack.c.h.b16 %v163
    %v443 = vunpack.c.l.b16 %v164
    %v444 = vunpack.c.h.b16 %v164
    %v445 = vunpack.c.l.b16 %v165
    %v446 = vunpack.c.h.b16 %v165
    %v447 = vunpack.c.l.b16 %v166
    %v448 = vunpack.c.h.b16 %v166
    %v449 = vunpack.c.l.b16 %v167
    %v450 = vunpack.c.h.b16 %v167
    %v451 = vunpack.c.l.b16 %v168
    %v452 = vunpack.c.h.b16 %v168
    %v453 = vunpack.c.l.b16 %v169
    %v454 = vunpack.c.h.b16 %v169
    %v455 = vunpack.c.l.b16 %v170
    %v456 = vunpack.c.h.b16 %v170
    %v457 = vunpack.c.l.b16 %v171
    %v458 = vunpack.c.h.b16 %v171
    %v459 = vunpack.c.l.b16 %v172
    %v460 = vunpack.c.h.b16 %v172
    %v461 = vunpack.c.l.b16 %v173
    %v462 = vunpack.c.h.b16 %v173
    %v463 = vpack.c.b16 %v401, %v399
    %v464 = vpack.c.b16 %v402, %v400
    %v465 = vpack.c.b16 %v405, %v403
    %v466 = vpack.c.b16 %v406, %v404
    %v467 = vpack.c.b16 %v409, %v407
    %v468 = vpack.c.b16 %v410, %v408
    %v469 = vpack.c.b16 %v413, %v411
    %v470 = vpack.c.b16 %v414, %v412
    %v471 = vpack.c.b16 %v417, %v415
    %v472 = vpack.c.b16 %v418, %v416
    %v473 = vpack.c.b16 %v421, %v419
    %v474 = vpack.c.b16 %v422, %v420
    %v475 = vpack.c.b16 %v425, %v423
    %v476 = vpack.c.b16 %v426, %v424
    %v477 = vpack.c.b16 %v429, %v427
    %v478 = vpack.c.b16 %v430, %v428
    %v479 = vpack.c.b16 %v433, %v431
    %v480 = vpack.c.b16 %v434, %v432
    %v481 = vpack.c.b16 %v437, %v435
    %v482 = vpack.c.b16 %v438, %v436
    %v483 = vpack.c.b16 %v441, %v439
    %v484 = vpack.c.b16 %v442, %v440
    %v485 = vpack.c.b16 %v445, %v443
    %v486 = vpack.c.b16 %v446, %v444
    %v487 = vpack.c.b16 %v449, %v447
    %v488 = vpack.c.b16 %v450, %v448
    %v489 = vpack.c.b16 %v453, %v451
    %v490 = vpack.c.b16 %v454, %v452
    %v491 = vpack.c.b16 %v457, %v455
    %v492 = vpack.c.b16 %v458, %v456
    %v493 = vpack.c.b16 %v461, %v459
    %v494 = vpack.c.b16 %v462, %v460
    %527 = vmatprep.subr.bf16.mxu0 %v464
    %528 = vmatpush1.bf16.msra.mxu0 %v463
    %529 = vmatprep.subr.bf16.mxu0 %v466
    %530 = vmatpush1.bf16.msra.mxu0 %v465
    %531 = vmatprep.subr.bf16.mxu0 %v468
    %532 = vmatpush1.bf16.msra.mxu0 %v467
    %533 = vmatprep.subr.bf16.mxu0 %v470
    %534 = vmatpush1.bf16.msra.mxu0 %v469
    %535 = vmatprep.subr.bf16.mxu0 %v472
    %536 = vmatpush1.bf16.msra.mxu0 %v471
    %537 = vmatprep.subr.bf16.mxu0 %v474
    %538 = vmatpush1.bf16.msra.mxu0 %v473
    %539 = vmatprep.subr.bf16.mxu0 %v476
    %540 = vmatpush1.bf16.msra.mxu0 %v475
    %541 = vmatprep.subr.bf16.mxu0 %v478
    %542 = vmatpush1.bf16.msra.mxu0 %v477
    %543 = vmatprep.subr.bf16.mxu0 %v480
    %544 = vmatpush1.bf16.msra.mxu0 %v479
    %545 = vmatprep.subr.bf16.mxu0 %v482
    %546 = vmatpush1.bf16.msra.mxu0 %v481
    %547 = vmatprep.subr.bf16.mxu0 %v484
    %548 = vmatpush1.bf16.msra.mxu0 %v483
    %549 = vmatprep.subr.bf16.mxu0 %v486
    %550 = vmatpush1.bf16.msra.mxu0 %v485
    %551 = vmatprep.subr.bf16.mxu0 %v488
    %552 = vmatpush1.bf16.msra.mxu0 %v487
    %553 = vmatprep.subr.bf16.mxu0 %v490
    %554 = vmatpush1.bf16.msra.mxu0 %v489
    %555 = vmatprep.subr.bf16.mxu0 %v492
    %556 = vmatpush1.bf16.msra.mxu0 %v491
    %557 = vmatprep.subr.bf16.mxu0 %v494
    %558 = vmatpush1.bf16.msra.mxu0 %v493
    %559 = vmatprep.mubr.bf16.mxu0 %v141
    %560 = vmatmul.mubr.bf16.gmra.mrb[0].mxu0 %v140
    %v561 = vpop.f32.mrb[0].mxu0
    %v562 = vadd.f32 0.0, %v561
    %v563 = vpop.f32.mrb[0].mxu0
    %v564 = vadd.f32 0.0, %v563
    %v565 = vpop.f32.mrb[0].mxu0
    %v566 = vpop.f32.mrb[0].mxu0
    %567 = vdwg.mxu0
    %s568 = sshra.s32 %s366, 7
    %s569 = sand.u32 %s366, 127
    %s570 = smul.addr %s568, 8
    %s571 = scalar_lea.vmem [#allocation2], %s570
    %572 = vst [vmem:[%s571] sm:$0xff] %v562
    %573 = vst [vmem:[%s571 + $0x8] sm:$0xff] %v564
    %v574 = vpack.c.bf16 %v176, %v174
    %v575 = vpack.c.bf16 %v177, %v175
    %v576 = vpack.c.bf16 %v180, %v178
    %v577 = vpack.c.bf16 %v181, %v179
    %v578 = vpack.c.bf16 %v184, %v182
    %v579 = vpack.c.bf16 %v185, %v183
    %v580 = vpack.c.bf16 %v188, %v186
    %v581 = vpack.c.bf16 %v189, %v187
    %v582 = vpack.c.bf16 %v192, %v190
    %v583 = vpack.c.bf16 %v193, %v191
    %v584 = vpack.c.bf16 %v196, %v194
    %v585 = vpack.c.bf16 %v197, %v195
    %v586 = vpack.c.bf16 %v200, %v198
    %v587 = vpack.c.bf16 %v201, %v199
    %v588 = vpack.c.bf16 %v204, %v202
    %v589 = vpack.c.bf16 %v205, %v203
    %v590 = vpack.c.bf16 %v208, %v206
    %v591 = vpack.c.bf16 %v209, %v207
    %v592 = vpack.c.bf16 %v212, %v210
    %v593 = vpack.c.bf16 %v213, %v211
    %v594 = vpack.c.bf16 %v216, %v214
    %v595 = vpack.c.bf16 %v217, %v215
    %v596 = vpack.c.bf16 %v220, %v218
    %v597 = vpack.c.bf16 %v221, %v219
    %v598 = vpack.c.bf16 %v224, %v222
    %v599 = vpack.c.bf16 %v225, %v223
    %v600 = vpack.c.bf16 %v228, %v226
    %v601 = vpack.c.bf16 %v229, %v227
    %v602 = vpack.c.bf16 %v232, %v230
    %v603 = vpack.c.bf16 %v233, %v231
    %v604 = vpack.c.bf16 %v236, %v234
    %v605 = vpack.c.bf16 %v237, %v235
    %v606 = vunpack.c.l.bf16 %v574
    %v607 = vunpack.c.l.bf16 %v575
    %v608 = vunpack.c.h.bf16 %v574
    %v609 = vunpack.c.h.bf16 %v575
    %v610 = vunpack.c.l.bf16 %v576
    %v611 = vunpack.c.l.bf16 %v577
    %v612 = vunpack.c.h.bf16 %v576
    %v613 = vunpack.c.h.bf16 %v577
    %v614 = vunpack.c.l.bf16 %v578
    %v615 = vunpack.c.l.bf16 %v579
    %v616 = vunpack.c.h.bf16 %v578
    %v617 = vunpack.c.h.bf16 %v579
    %v618 = vunpack.c.l.bf16 %v580
    %v619 = vunpack.c.l.bf16 %v581
    %v620 = vunpack.c.h.bf16 %v580
    %v621 = vunpack.c.h.bf16 %v581
    %v622 = vunpack.c.l.bf16 %v582
    %v623 = vunpack.c.l.bf16 %v583
    %v624 = vunpack.c.h.bf16 %v582
    %v625 = vunpack.c.h.bf16 %v583
    %v626 = vunpack.c.l.bf16 %v584
    %v627 = vunpack.c.l.bf16 %v585
    %v628 = vunpack.c.h.bf16 %v584
    %v629 = vunpack.c.h.bf16 %v585
    %v630 = vunpack.c.l.bf16 %v586
    %v631 = vunpack.c.l.bf16 %v587
    %v632 = vunpack.c.h.bf16 %v586
    %v633 = vunpack.c.h.bf16 %v587
    %v634 = vunpack.c.l.bf16 %v588
    %v635 = vunpack.c.l.bf16 %v589
    %v636 = vunpack.c.h.bf16 %v588
    %v637 = vunpack.c.h.bf16 %v589
    %v638 = vunpack.c.l.bf16 %v590
    %v639 = vunpack.c.l.bf16 %v591
    %v640 = vunpack.c.h.bf16 %v590
    %v641 = vunpack.c.h.bf16 %v591
    %v642 = vunpack.c.l.bf16 %v592
    %v643 = vunpack.c.l.bf16 %v593
    %v644 = vunpack.c.h.bf16 %v592
    %v645 = vunpack.c.h.bf16 %v593
    %v646 = vunpack.c.l.bf16 %v594
    %v647 = vunpack.c.l.bf16 %v595
    %v648 = vunpack.c.h.bf16 %v594
    %v649 = vunpack.c.h.bf16 %v595
    %v650 = vunpack.c.l.bf16 %v596
    %v651 = vunpack.c.l.bf16 %v597
    %v652 = vunpack.c.h.bf16 %v596
    %v653 = vunpack.c.h.bf16 %v597
    %v654 = vunpack.c.l.bf16 %v598
    %v655 = vunpack.c.l.bf16 %v599
    %v656 = vunpack.c.h.bf16 %v598
    %v657 = vunpack.c.h.bf16 %v599
    %v658 = vunpack.c.l.bf16 %v600
    %v659 = vunpack.c.l.bf16 %v601
    %v660 = vunpack.c.h.bf16 %v600
    %v661 = vunpack.c.h.bf16 %v601
    %v662 = vunpack.c.l.bf16 %v602
    %v663 = vunpack.c.l.bf16 %v603
    %v664 = vunpack.c.h.bf16 %v602
    %v665 = vunpack.c.h.bf16 %v603
    %v666 = vunpack.c.l.bf16 %v604
    %v667 = vunpack.c.l.bf16 %v605
    %v668 = vunpack.c.h.bf16 %v604
    %v669 = vunpack.c.h.bf16 %v605
    %v670 = vsub.f32 %v174, %v606
    %v671 = vsub.f32 %v175, %v607
    %v672 = vsub.f32 %v176, %v608
    %v673 = vsub.f32 %v177, %v609
    %v674 = vsub.f32 %v178, %v610
    %v675 = vsub.f32 %v179, %v611
    %v676 = vsub.f32 %v180, %v612
    %v677 = vsub.f32 %v181, %v613
    %v678 = vsub.f32 %v182, %v614
    %v679 = vsub.f32 %v183, %v615
    %v680 = vsub.f32 %v184, %v616
    %v681 = vsub.f32 %v185, %v617
    %v682 = vsub.f32 %v186, %v618
    %v683 = vsub.f32 %v187, %v619
    %v684 = vsub.f32 %v188, %v620
    %v685 = vsub.f32 %v189, %v621
    %v686 = vsub.f32 %v190, %v622
    %v687 = vsub.f32 %v191, %v623
    %v688 = vsub.f32 %v192, %v624
    %v689 = vsub.f32 %v193, %v625
    %v690 = vsub.f32 %v194, %v626
    %v691 = vsub.f32 %v195, %v627
    %v692 = vsub.f32 %v196, %v628
    %v693 = vsub.f32 %v197, %v629
    %v694 = vsub.f32 %v198, %v630
    %v695 = vsub.f32 %v199, %v631
    %v696 = vsub.f32 %v200, %v632
    %v697 = vsub.f32 %v201, %v633
    %v698 = vsub.f32 %v202, %v634
    %v699 = vsub.f32 %v203, %v635
    %v700 = vsub.f32 %v204, %v636
    %v701 = vsub.f32 %v205, %v637
    %v702 = vsub.f32 %v206, %v638
    %v703 = vsub.f32 %v207, %v639
    %v704 = vsub.f32 %v208, %v640
    %v705 = vsub.f32 %v209, %v641
    %v706 = vsub.f32 %v210, %v642
    %v707 = vsub.f32 %v211, %v643
    %v708 = vsub.f32 %v212, %v644
    %v709 = vsub.f32 %v213, %v645
    %v710 = vsub.f32 %v214, %v646
    %v711 = vsub.f32 %v215, %v647
    %v712 = vsub.f32 %v216, %v648
    %v713 = vsub.f32 %v217, %v649
    %v714 = vsub.f32 %v218, %v650
    %v715 = vsub.f32 %v219, %v651
    %v716 = vsub.f32 %v220, %v652
    %v717 = vsub.f32 %v221, %v653
    %v718 = vsub.f32 %v222, %v654
    %v719 = vsub.f32 %v223, %v655
    %v720 = vsub.f32 %v224, %v656
    %v721 = vsub.f32 %v225, %v657
    %v722 = vsub.f32 %v226, %v658
    %v723 = vsub.f32 %v227, %v659
    %v724 = vsub.f32 %v228, %v660
    %v725 = vsub.f32 %v229, %v661
    %v726 = vsub.f32 %v230, %v662
    %v727 = vsub.f32 %v231, %v663
    %v728 = vsub.f32 %v232, %v664
    %v729 = vsub.f32 %v233, %v665
    %v730 = vsub.f32 %v234, %v666
    %v731 = vsub.f32 %v235, %v667
    %v732 = vsub.f32 %v236, %v668
    %v733 = vsub.f32 %v237, %v669
    %v734 = vpack.c.bf16 %v672, %v670
    %v735 = vpack.c.bf16 %v673, %v671
    %v736 = vpack.c.bf16 %v676, %v674
    %v737 = vpack.c.bf16 %v677, %v675
    %v738 = vpack.c.bf16 %v680, %v678
    %v739 = vpack.c.bf16 %v681, %v679
    %v740 = vpack.c.bf16 %v684, %v682
    %v741 = vpack.c.bf16 %v685, %v683
    %v742 = vpack.c.bf16 %v688, %v686
    %v743 = vpack.c.bf16 %v689, %v687
    %v744 = vpack.c.bf16 %v692, %v690
    %v745 = vpack.c.bf16 %v693, %v691
    %v746 = vpack.c.bf16 %v696, %v694
    %v747 = vpack.c.bf16 %v697, %v695
    %v748 = vpack.c.bf16 %v700, %v698
    %v749 = vpack.c.bf16 %v701, %v699
    %v750 = vpack.c.bf16 %v704, %v702
    %v751 = vpack.c.bf16 %v705, %v703
    %v752 = vpack.c.bf16 %v708, %v706
    %v753 = vpack.c.bf16 %v709, %v707
    %v754 = vpack.c.bf16 %v712, %v710
    %v755 = vpack.c.bf16 %v713, %v711
    %v756 = vpack.c.bf16 %v716, %v714
    %v757 = vpack.c.bf16 %v717, %v715
    %v758 = vpack.c.bf16 %v720, %v718
    %v759 = vpack.c.bf16 %v721, %v719
    %v760 = vpack.c.bf16 %v724, %v722
    %v761 = vpack.c.bf16 %v725, %v723
    %v762 = vpack.c.bf16 %v728, %v726
    %v763 = vpack.c.bf16 %v729, %v727
    %v764 = vpack.c.bf16 %v732, %v730
    %v765 = vpack.c.bf16 %v733, %v731
    %766 = vmatprep.subr.bf16.mxu0 %v735
    %767 = vmatpush1.bf16.msra.mxu0 %v734
    %768 = vmatprep.subr.bf16.mxu0 %v737
    %769 = vmatpush1.bf16.msra.mxu0 %v736
    %770 = vmatprep.subr.bf16.mxu0 %v739
    %771 = vmatpush1.bf16.msra.mxu0 %v738
    %772 = vmatprep.subr.bf16.mxu0 %v741
    %773 = vmatpush1.bf16.msra.mxu0 %v740
    %774 = vmatprep.subr.bf16.mxu0 %v743
    %775 = vmatpush1.bf16.msra.mxu0 %v742
    %776 = vmatprep.subr.bf16.mxu0 %v745
    %777 = vmatpush1.bf16.msra.mxu0 %v744
    %778 = vmatprep.subr.bf16.mxu0 %v747
    %779 = vmatpush1.bf16.msra.mxu0 %v746
    %780 = vmatprep.subr.bf16.mxu0 %v749
    %781 = vmatpush1.bf16.msra.mxu0 %v748
    %782 = vmatprep.subr.bf16.mxu0 %v751
    %783 = vmatpush1.bf16.msra.mxu0 %v750
    %784 = vmatprep.subr.bf16.mxu0 %v753
    %785 = vmatpush1.bf16.msra.mxu0 %v752
    %786 = vmatprep.subr.bf16.mxu0 %v755
    %787 = vmatpush1.bf16.msra.mxu0 %v754
    %788 = vmatprep.subr.bf16.mxu0 %v757
    %789 = vmatpush1.bf16.msra.mxu0 %v756
    %790 = vmatprep.subr.bf16.mxu0 %v759
    %791 = vmatpush1.bf16.msra.mxu0 %v758
    %792 = vmatprep.subr.bf16.mxu0 %v761
    %793 = vmatpush1.bf16.msra.mxu0 %v760
    %794 = vmatprep.subr.bf16.mxu0 %v763
    %795 = vmatpush1.bf16.msra.mxu0 %v762
    %796 = vmatprep.subr.bf16.mxu0 %v765
    %797 = vmatpush1.bf16.msra.mxu0 %v764
    %798 = vmatprep.mubr.bf16.mxu0 %v141
    %799 = vmatmul.mubr.bf16.gmra.mrb[0].mxu0 %v140
    %v800 = vpop.f32.mrb[0].mxu0
    %v801 = vadd.f32 0.0, %v800
    %v802 = vpop.f32.mrb[0].mxu0
    %v803 = vadd.f32 0.0, %v802
    %v804 = vpop.f32.mrb[0].mxu0
    %v805 = vpop.f32.mrb[0].mxu0
    %806 = vdwg.mxu0
    %807 = vmatprep.subr.bf16.mxu0 %v575
    %808 = vmatpush1.bf16.msra.mxu0 %v574
    %809 = vmatprep.subr.bf16.mxu0 %v577
    %810 = vmatpush1.bf16.msra.mxu0 %v576
    %811 = vmatprep.subr.bf16.mxu0 %v579
    %812 = vmatpush1.bf16.msra.mxu0 %v578
    %813 = vmatprep.subr.bf16.mxu0 %v581
    %814 = vmatpush1.bf16.msra.mxu0 %v580
    %815 = vmatprep.subr.bf16.mxu0 %v583
    %816 = vmatpush1.bf16.msra.mxu0 %v582
    %817 = vmatprep.subr.bf16.mxu0 %v585
    %818 = vmatpush1.bf16.msra.mxu0 %v584
    %819 = vmatprep.subr.bf16.mxu0 %v587
    %820 = vmatpush1.bf16.msra.mxu0 %v586
    %821 = vmatprep.subr.bf16.mxu0 %v589
    %822 = vmatpush1.bf16.msra.mxu0 %v588
    %823 = vmatprep.subr.bf16.mxu0 %v591
    %824 = vmatpush1.bf16.msra.mxu0 %v590
    %825 = vmatprep.subr.bf16.mxu0 %v593
    %826 = vmatpush1.bf16.msra.mxu0 %v592
    %827 = vmatprep.subr.bf16.mxu0 %v595
    %828 = vmatpush1.bf16.msra.mxu0 %v594
    %829 = vmatprep.subr.bf16.mxu0 %v597
    %830 = vmatpush1.bf16.msra.mxu0 %v596
    %831 = vmatprep.subr.bf16.mxu0 %v599
    %832 = vmatpush1.bf16.msra.mxu0 %v598
    %833 = vmatprep.subr.bf16.mxu0 %v601
    %834 = vmatpush1.bf16.msra.mxu0 %v600
    %835 = vmatprep.subr.bf16.mxu0 %v603
    %836 = vmatpush1.bf16.msra.mxu0 %v602
    %837 = vmatprep.subr.bf16.mxu0 %v605
    %838 = vmatpush1.bf16.msra.mxu0 %v604
    %839 = vmatprep.mubr.bf16.mxu0 %v141
    %840 = vmatmul.mubr.bf16.gmra.mrb[0].mxu0 %v140
    %v841 = vpop.f32.mrb[0].mxu0
    %v842 = vadd.f32 %v801, %v841
    %v843 = vpop.f32.mrb[0].mxu0
    %v844 = vadd.f32 %v803, %v843
    %v845 = vpop.f32.mrb[0].mxu0
    %v846 = vpop.f32.mrb[0].mxu0
    %847 = vdwg.mxu0
    %s848 = smul.addr %s568, 8
    %s849 = scalar_lea.vmem [#allocation3], %s848
    %850 = vst [vmem:[%s849] sm:$0xff] %v842
    %851 = vst [vmem:[%s849 + $0x8] sm:$0xff] %v844
    %v852 = vpack.c.bf16 %v240, %v238
    %v853 = vpack.c.bf16 %v241, %v239
    %v854 = vpack.c.bf16 %v244, %v242
    %v855 = vpack.c.bf16 %v245, %v243
    %v856 = vpack.c.bf16 %v248, %v246
    %v857 = vpack.c.bf16 %v249, %v247
    %v858 = vpack.c.bf16 %v252, %v250
    %v859 = vpack.c.bf16 %v253, %v251
    %v860 = vpack.c.bf16 %v256, %v254
    %v861 = vpack.c.bf16 %v257, %v255
    %v862 = vpack.c.bf16 %v260, %v258
    %v863 = vpack.c.bf16 %v261, %v259
    %v864 = vpack.c.bf16 %v264, %v262
    %v865 = vpack.c.bf16 %v265, %v263
    %v866 = vpack.c.bf16 %v268, %v266
    %v867 = vpack.c.bf16 %v269, %v267
    %v868 = vpack.c.bf16 %v272, %v270
    %v869 = vpack.c.bf16 %v273, %v271
    %v870 = vpack.c.bf16 %v276, %v274
    %v871 = vpack.c.bf16 %v277, %v275
    %v872 = vpack.c.bf16 %v280, %v278
    %v873 = vpack.c.bf16 %v281, %v279
    %v874 = vpack.c.bf16 %v284, %v282
    %v875 = vpack.c.bf16 %v285, %v283
    %v876 = vpack.c.bf16 %v288, %v286
    %v877 = vpack.c.bf16 %v289, %v287
    %v878 = vpack.c.bf16 %v292, %v290
    %v879 = vpack.c.bf16 %v293, %v291
    %v880 = vpack.c.bf16 %v296, %v294
    %v881 = vpack.c.bf16 %v297, %v295
    %v882 = vpack.c.bf16 %v300, %v298
    %v883 = vpack.c.bf16 %v301, %v299
    %v884 = vunpack.c.l.bf16 %v852
    %v885 = vunpack.c.l.bf16 %v853
    %v886 = vunpack.c.h.bf16 %v852
    %v887 = vunpack.c.h.bf16 %v853
    %v888 = vunpack.c.l.bf16 %v854
    %v889 = vunpack.c.l.bf16 %v855
    %v890 = vunpack.c.h.bf16 %v854
    %v891 = vunpack.c.h.bf16 %v855
    %v892 = vunpack.c.l.bf16 %v856
    %v893 = vunpack.c.l.bf16 %v857
    %v894 = vunpack.c.h.bf16 %v856
    %v895 = vunpack.c.h.bf16 %v857
    %v896 = vunpack.c.l.bf16 %v858
    %v897 = vunpack.c.l.bf16 %v859
    %v898 = vunpack.c.h.bf16 %v858
    %v899 = vunpack.c.h.bf16 %v859
    %v900 = vunpack.c.l.bf16 %v860
    %v901 = vunpack.c.l.bf16 %v861
    %v902 = vunpack.c.h.bf16 %v860
    %v903 = vunpack.c.h.bf16 %v861
    %v904 = vunpack.c.l.bf16 %v862
    %v905 = vunpack.c.l.bf16 %v863
    %v906 = vunpack.c.h.bf16 %v862
    %v907 = vunpack.c.h.bf16 %v863
    %v908 = vunpack.c.l.bf16 %v864
    %v909 = vunpack.c.l.bf16 %v865
    %v910 = vunpack.c.h.bf16 %v864
    %v911 = vunpack.c.h.bf16 %v865
    %v912 = vunpack.c.l.bf16 %v866
    %v913 = vunpack.c.l.bf16 %v867
    %v914 = vunpack.c.h.bf16 %v866
    %v915 = vunpack.c.h.bf16 %v867
    %v916 = vunpack.c.l.bf16 %v868
    %v917 = vunpack.c.l.bf16 %v869
    %v918 = vunpack.c.h.bf16 %v868
    %v919 = vunpack.c.h.bf16 %v869
    %v920 = vunpack.c.l.bf16 %v870
    %v921 = vunpack.c.l.bf16 %v871
    %v922 = vunpack.c.h.bf16 %v870
    %v923 = vunpack.c.h.bf16 %v871
    %v924 = vunpack.c.l.bf16 %v872
    %v925 = vunpack.c.l.bf16 %v873
    %v926 = vunpack.c.h.bf16 %v872
    %v927 = vunpack.c.h.bf16 %v873
    %v928 = vunpack.c.l.bf16 %v874
    %v929 = vunpack.c.l.bf16 %v875
    %v930 = vunpack.c.h.bf16 %v874
    %v931 = vunpack.c.h.bf16 %v875
    %v932 = vunpack.c.l.bf16 %v876
    %v933 = vunpack.c.l.bf16 %v877
    %v934 = vunpack.c.h.bf16 %v876
    %v935 = vunpack.c.h.bf16 %v877
    %v936 = vunpack.c.l.bf16 %v878
    %v937 = vunpack.c.l.bf16 %v879
    %v938 = vunpack.c.h.bf16 %v878
    %v939 = vunpack.c.h.bf16 %v879
    %v940 = vunpack.c.l.bf16 %v880
    %v941 = vunpack.c.l.bf16 %v881
    %v942 = vunpack.c.h.bf16 %v880
    %v943 = vunpack.c.h.bf16 %v881
    %v944 = vunpack.c.l.bf16 %v882
    %v945 = vunpack.c.l.bf16 %v883
    %v946 = vunpack.c.h.bf16 %v882
    %v947 = vunpack.c.h.bf16 %v883
    %v948 = vsub.f32 %v238, %v884
    %v949 = vsub.f32 %v239, %v885
    %v950 = vsub.f32 %v240, %v886
    %v951 = vsub.f32 %v241, %v887
    %v952 = vsub.f32 %v242, %v888
    %v953 = vsub.f32 %v243, %v889
    %v954 = vsub.f32 %v244, %v890
    %v955 = vsub.f32 %v245, %v891
    %v956 = vsub.f32 %v246, %v892
    %v957 = vsub.f32 %v247, %v893
    %v958 = vsub.f32 %v248, %v894
    %v959 = vsub.f32 %v249, %v895
    %v960 = vsub.f32 %v250, %v896
    %v961 = vsub.f32 %v251, %v897
    %v962 = vsub.f32 %v252, %v898
    %v963 = vsub.f32 %v253, %v899
    %v964 = vsub.f32 %v254, %v900
    %v965 = vsub.f32 %v255, %v901
    %v966 = vsub.f32 %v256, %v902
    %v967 = vsub.f32 %v257, %v903
    %v968 = vsub.f32 %v258, %v904
    %v969 = vsub.f32 %v259, %v905
    %v970 = vsub.f32 %v260, %v906
    %v971 = vsub.f32 %v261, %v907
    %v972 = vsub.f32 %v262, %v908
    %v973 = vsub.f32 %v263, %v909
    %v974 = vsub.f32 %v264, %v910
    %v975 = vsub.f32 %v265, %v911
    %v976 = vsub.f32 %v266, %v912
    %v977 = vsub.f32 %v267, %v913
    %v978 = vsub.f32 %v268, %v914
    %v979 = vsub.f32 %v269, %v915
    %v980 = vsub.f32 %v270, %v916
    %v981 = vsub.f32 %v271, %v917
    %v982 = vsub.f32 %v272, %v918
    %v983 = vsub.f32 %v273, %v919
    %v984 = vsub.f32 %v274, %v920
    %v985 = vsub.f32 %v275, %v921
    %v986 = vsub.f32 %v276, %v922
    %v987 = vsub.f32 %v277, %v923
    %v988 = vsub.f32 %v278, %v924
    %v989 = vsub.f32 %v279, %v925
    %v990 = vsub.f32 %v280, %v926
    %v991 = vsub.f32 %v281, %v927
    %v992 = vsub.f32 %v282, %v928
    %v993 = vsub.f32 %v283, %v929
    %v994 = vsub.f32 %v284, %v930
    %v995 = vsub.f32 %v285, %v931
    %v996 = vsub.f32 %v286, %v932
    %v997 = vsub.f32 %v287, %v933
    %v998 = vsub.f32 %v288, %v934
    %v999 = vsub.f32 %v289, %v935
    %v1000 = vsub.f32 %v290, %v936
    %v1001 = vsub.f32 %v291, %v937
    %v1002 = vsub.f32 %v292, %v938
    %v1003 = vsub.f32 %v293, %v939
    %v1004 = vsub.f32 %v294, %v940
    %v1005 = vsub.f32 %v295, %v941
    %v1006 = vsub.f32 %v296, %v942
    %v1007 = vsub.f32 %v297, %v943
    %v1008 = vsub.f32 %v298, %v944
    %v1009 = vsub.f32 %v299, %v945
    %v1010 = vsub.f32 %v300, %v946
    %v1011 = vsub.f32 %v301, %v947
    %v1012 = vpack.c.bf16 %v950, %v948
    %v1013 = vpack.c.bf16 %v951, %v949
    %v1014 = vpack.c.bf16 %v954, %v952
    %v1015 = vpack.c.bf16 %v955, %v953
    %v1016 = vpack.c.bf16 %v958, %v956
    %v1017 = vpack.c.bf16 %v959, %v957
    %v1018 = vpack.c.bf16 %v962, %v960
    %v1019 = vpack.c.bf16 %v963, %v961
    %v1020 = vpack.c.bf16 %v966, %v964
    %v1021 = vpack.c.bf16 %v967, %v965
    %v1022 = vpack.c.bf16 %v970, %v968
    %v1023 = vpack.c.bf16 %v971, %v969
    %v1024 = vpack.c.bf16 %v974, %v972
    %v1025 = vpack.c.bf16 %v975, %v973
    %v1026 = vpack.c.bf16 %v978, %v976
    %v1027 = vpack.c.bf16 %v979, %v977
    %v1028 = vpack.c.bf16 %v982, %v980
    %v1029 = vpack.c.bf16 %v983, %v981
    %v1030 = vpack.c.bf16 %v986, %v984
    %v1031 = vpack.c.bf16 %v987, %v985
    %v1032 = vpack.c.bf16 %v990, %v988
    %v1033 = vpack.c.bf16 %v991, %v989
    %v1034 = vpack.c.bf16 %v994, %v992
    %v1035 = vpack.c.bf16 %v995, %v993
    %v1036 = vpack.c.bf16 %v998, %v996
    %v1037 = vpack.c.bf16 %v999, %v997
    %v1038 = vpack.c.bf16 %v1002, %v1000
    %v1039 = vpack.c.bf16 %v1003, %v1001
    %v1040 = vpack.c.bf16 %v1006, %v1004
    %v1041 = vpack.c.bf16 %v1007, %v1005
    %v1042 = vpack.c.bf16 %v1010, %v1008
    %v1043 = vpack.c.bf16 %v1011, %v1009
    %1044 = vmatprep.subr.bf16.mxu0 %v1013
    %1045 = vmatpush1.bf16.msra.mxu0 %v1012
    %1046 = vmatprep.subr.bf16.mxu0 %v1015
    %1047 = vmatpush1.bf16.msra.mxu0 %v1014
    %1048 = vmatprep.subr.bf16.mxu0 %v1017
    %1049 = vmatpush1.bf16.msra.mxu0 %v1016
    %1050 = vmatprep.subr.bf16.mxu0 %v1019
    %1051 = vmatpush1.bf16.msra.mxu0 %v1018
    %1052 = vmatprep.subr.bf16.mxu0 %v1021
    %1053 = vmatpush1.bf16.msra.mxu0 %v1020
    %1054 = vmatprep.subr.bf16.mxu0 %v1023
    %1055 = vmatpush1.bf16.msra.mxu0 %v1022
    %1056 = vmatprep.subr.bf16.mxu0 %v1025
    %1057 = vmatpush1.bf16.msra.mxu0 %v1024
    %1058 = vmatprep.subr.bf16.mxu0 %v1027
    %1059 = vmatpush1.bf16.msra.mxu0 %v1026
    %1060 = vmatprep.subr.bf16.mxu0 %v1029
    %1061 = vmatpush1.bf16.msra.mxu0 %v1028
    %1062 = vmatprep.subr.bf16.mxu0 %v1031
    %1063 = vmatpush1.bf16.msra.mxu0 %v1030
    %1064 = vmatprep.subr.bf16.mxu0 %v1033
    %1065 = vmatpush1.bf16.msra.mxu0 %v1032
    %1066 = vmatprep.subr.bf16.mxu0 %v1035
    %1067 = vmatpush1.bf16.msra.mxu0 %v1034
    %1068 = vmatprep.subr.bf16.mxu0 %v1037
    %1069 = vmatpush1.bf16.msra.mxu0 %v1036
    %1070 = vmatprep.subr.bf16.mxu0 %v1039
    %1071 = vmatpush1.bf16.msra.mxu0 %v1038
    %1072 = vmatprep.subr.bf16.mxu0 %v1041
    %1073 = vmatpush1.bf16.msra.mxu0 %v1040
    %1074 = vmatprep.subr.bf16.mxu0 %v1043
    %1075 = vmatpush1.bf16.msra.mxu0 %v1042
    %1076 = vmatprep.mubr.bf16.mxu0 %v141
    %1077 = vmatmul.mubr.bf16.gmra.mrb[0].mxu0 %v140
    %v1078 = vpop.f32.mrb[0].mxu0
    %v1079 = vadd.f32 0.0, %v1078
    %v1080 = vpop.f32.mrb[0].mxu0
    %v1081 = vadd.f32 0.0, %v1080
    %v1082 = vpop.f32.mrb[0].mxu0
    %v1083 = vpop.f32.mrb[0].mxu0
    %1084 = vdwg.mxu0
    %1085 = vmatprep.subr.bf16.mxu0 %v853
    %1086 = vmatpush1.bf16.msra.mxu0 %v852
    %1087 = vmatprep.subr.bf16.mxu0 %v855
    %1088 = vmatpush1.bf16.msra.mxu0 %v854
    %1089 = vmatprep.subr.bf16.mxu0 %v857
    %1090 = vmatpush1.bf16.msra.mxu0 %v856
    %1091 = vmatprep.subr.bf16.mxu0 %v859
    %1092 = vmatpush1.bf16.msra.mxu0 %v858
    %1093 = vmatprep.subr.bf16.mxu0 %v861
    %1094 = vmatpush1.bf16.msra.mxu0 %v860
    %1095 = vmatprep.subr.bf16.mxu0 %v863
    %1096 = vmatpush1.bf16.msra.mxu0 %v862
    %1097 = vmatprep.subr.bf16.mxu0 %v865
    %1098 = vmatpush1.bf16.msra.mxu0 %v864
    %1099 = vmatprep.subr.bf16.mxu0 %v867
    %1100 = vmatpush1.bf16.msra.mxu0 %v866
    %1101 = vmatprep.subr.bf16.mxu0 %v869
    %1102 = vmatpush1.bf16.msra.mxu0 %v868
    %1103 = vmatprep.subr.bf16.mxu0 %v871
    %1104 = vmatpush1.bf16.msra.mxu0 %v870
    %1105 = vmatprep.subr.bf16.mxu0 %v873
    %1106 = vmatpush1.bf16.msra.mxu0 %v872
    %1107 = vmatprep.subr.bf16.mxu0 %v875
    %1108 = vmatpush1.bf16.msra.mxu0 %v874
    %1109 = vmatprep.subr.bf16.mxu0 %v877
    %1110 = vmatpush1.bf16.msra.mxu0 %v876
    %1111 = vmatprep.subr.bf16.mxu0 %v879
    %1112 = vmatpush1.bf16.msra.mxu0 %v878
    %1113 = vmatprep.subr.bf16.mxu0 %v881
    %1114 = vmatpush1.bf16.msra.mxu0 %v880
    %1115 = vmatprep.subr.bf16.mxu0 %v883
    %1116 = vmatpush1.bf16.msra.mxu0 %v882
    %1117 = vmatprep.mubr.bf16.mxu0 %v141
    %1118 = vmatmul.mubr.bf16.gmra.mrb[0].mxu0 %v140
    %v1119 = vpop.f32.mrb[0].mxu0
    %v1120 = vadd.f32 %v1079, %v1119
    %v1121 = vpop.f32.mrb[0].mxu0
    %v1122 = vadd.f32 %v1081, %v1121
    %v1123 = vpop.f32.mrb[0].mxu0
    %v1124 = vpop.f32.mrb[0].mxu0
    %1125 = vdwg.mxu0
    %s1126 = smul.addr %s568, 8
    %s1127 = scalar_lea.vmem [#allocation4], %s1126
    %1128 = vst [vmem:[%s1127] sm:$0xff] %v1120
    %1129 = vst [vmem:[%s1127 + $0x8] sm:$0xff] %v1122
    %v1130 = vpack.c.bf16 %v304, %v302
    %v1131 = vpack.c.bf16 %v305, %v303
    %v1132 = vpack.c.bf16 %v308, %v306
    %v1133 = vpack.c.bf16 %v309, %v307
    %v1134 = vpack.c.bf16 %v312, %v310
    %v1135 = vpack.c.bf16 %v313, %v311
    %v1136 = vpack.c.bf16 %v316, %v314
    %v1137 = vpack.c.bf16 %v317, %v315
    %v1138 = vpack.c.bf16 %v320, %v318
    %v1139 = vpack.c.bf16 %v321, %v319
    %v1140 = vpack.c.bf16 %v324, %v322
    %v1141 = vpack.c.bf16 %v325, %v323
    %v1142 = vpack.c.bf16 %v328, %v326
    %v1143 = vpack.c.bf16 %v329, %v327
    %v1144 = vpack.c.bf16 %v332, %v330
    %v1145 = vpack.c.bf16 %v333, %v331
    %v1146 = vpack.c.bf16 %v336, %v334
    %v1147 = vpack.c.bf16 %v337, %v335
    %v1148 = vpack.c.bf16 %v340, %v338
    %v1149 = vpack.c.bf16 %v341, %v339
    %v1150 = vpack.c.bf16 %v344, %v342
    %v1151 = vpack.c.bf16 %v345, %v343
    %v1152 = vpack.c.bf16 %v348, %v346
    %v1153 = vpack.c.bf16 %v349, %v347
    %v1154 = vpack.c.bf16 %v352, %v350
    %v1155 = vpack.c.bf16 %v353, %v351
    %v1156 = vpack.c.bf16 %v356, %v354
    %v1157 = vpack.c.bf16 %v357, %v355
    %v1158 = vpack.c.bf16 %v360, %v358
    %v1159 = vpack.c.bf16 %v361, %v359
    %v1160 = vpack.c.bf16 %v364, %v362
    %v1161 = vpack.c.bf16 %v365, %v363
    %v1162 = vunpack.c.l.bf16 %v1130
    %v1163 = vunpack.c.l.bf16 %v1131
    %v1164 = vunpack.c.h.bf16 %v1130
    %v1165 = vunpack.c.h.bf16 %v1131
    %v1166 = vunpack.c.l.bf16 %v1132
    %v1167 = vunpack.c.l.bf16 %v1133
    %v1168 = vunpack.c.h.bf16 %v1132
    %v1169 = vunpack.c.h.bf16 %v1133
    %v1170 = vunpack.c.l.bf16 %v1134
    %v1171 = vunpack.c.l.bf16 %v1135
    %v1172 = vunpack.c.h.bf16 %v1134
    %v1173 = vunpack.c.h.bf16 %v1135
    %v1174 = vunpack.c.l.bf16 %v1136
    %v1175 = vunpack.c.l.bf16 %v1137
    %v1176 = vunpack.c.h.bf16 %v1136
    %v1177 = vunpack.c.h.bf16 %v1137
    %v1178 = vunpack.c.l.bf16 %v1138
    %v1179 = vunpack.c.l.bf16 %v1139
    %v1180 = vunpack.c.h.bf16 %v1138
    %v1181 = vunpack.c.h.bf16 %v1139
    %v1182 = vunpack.c.l.bf16 %v1140
    %v1183 = vunpack.c.l.bf16 %v1141
    %v1184 = vunpack.c.h.bf16 %v1140
    %v1185 = vunpack.c.h.bf16 %v1141
    %v1186 = vunpack.c.l.bf16 %v1142
    %v1187 = vunpack.c.l.bf16 %v1143
    %v1188 = vunpack.c.h.bf16 %v1142
    %v1189 = vunpack.c.h.bf16 %v1143
    %v1190 = vunpack.c.l.bf16 %v1144
    %v1191 = vunpack.c.l.bf16 %v1145
    %v1192 = vunpack.c.h.bf16 %v1144
    %v1193 = vunpack.c.h.bf16 %v1145
    %v1194 = vunpack.c.l.bf16 %v1146
    %v1195 = vunpack.c.l.bf16 %v1147
    %v1196 = vunpack.c.h.bf16 %v1146
    %v1197 = vunpack.c.h.bf16 %v1147
    %v1198 = vunpack.c.l.bf16 %v1148
    %v1199 = vunpack.c.l.bf16 %v1149
    %v1200 = vunpack.c.h.bf16 %v1148
    %v1201 = vunpack.c.h.bf16 %v1149
    %v1202 = vunpack.c.l.bf16 %v1150
    %v1203 = vunpack.c.l.bf16 %v1151
    %v1204 = vunpack.c.h.bf16 %v1150
    %v1205 = vunpack.c.h.bf16 %v1151
    %v1206 = vunpack.c.l.bf16 %v1152
    %v1207 = vunpack.c.l.bf16 %v1153
    %v1208 = vunpack.c.h.bf16 %v1152
    %v1209 = vunpack.c.h.bf16 %v1153
    %v1210 = vunpack.c.l.bf16 %v1154
    %v1211 = vunpack.c.l.bf16 %v1155
    %v1212 = vunpack.c.h.bf16 %v1154
    %v1213 = vunpack.c.h.bf16 %v1155
    %v1214 = vunpack.c.l.bf16 %v1156
    %v1215 = vunpack.c.l.bf16 %v1157
    %v1216 = vunpack.c.h.bf16 %v1156
    %v1217 = vunpack.c.h.bf16 %v1157
    %v1218 = vunpack.c.l.bf16 %v1158
    %v1219 = vunpack.c.l.bf16 %v1159
    %v1220 = vunpack.c.h.bf16 %v1158
    %v1221 = vunpack.c.h.bf16 %v1159
    %v1222 = vunpack.c.l.bf16 %v1160
    %v1223 = vunpack.c.l.bf16 %v1161
    %v1224 = vunpack.c.h.bf16 %v1160
    %v1225 = vunpack.c.h.bf16 %v1161
    %v1226 = vsub.f32 %v302, %v1162
    %v1227 = vsub.f32 %v303, %v1163
    %v1228 = vsub.f32 %v304, %v1164
    %v1229 = vsub.f32 %v305, %v1165
    %v1230 = vsub.f32 %v306, %v1166
    %v1231 = vsub.f32 %v307, %v1167
    %v1232 = vsub.f32 %v308, %v1168
    %v1233 = vsub.f32 %v309, %v1169
    %v1234 = vsub.f32 %v310, %v1170
    %v1235 = vsub.f32 %v311, %v1171
    %v1236 = vsub.f32 %v312, %v1172
    %v1237 = vsub.f32 %v313, %v1173
    %v1238 = vsub.f32 %v314, %v1174
    %v1239 = vsub.f32 %v315, %v1175
    %v1240 = vsub.f32 %v316, %v1176
    %v1241 = vsub.f32 %v317, %v1177
    %v1242 = vsub.f32 %v318, %v1178
    %v1243 = vsub.f32 %v319, %v1179
    %v1244 = vsub.f32 %v320, %v1180
    %v1245 = vsub.f32 %v321, %v1181
    %v1246 = vsub.f32 %v322, %v1182
    %v1247 = vsub.f32 %v323, %v1183
    %v1248 = vsub.f32 %v324, %v1184
    %v1249 = vsub.f32 %v325, %v1185
    %v1250 = vsub.f32 %v326, %v1186
    %v1251 = vsub.f32 %v327, %v1187
    %v1252 = vsub.f32 %v328, %v1188
    %v1253 = vsub.f32 %v329, %v1189
    %v1254 = vsub.f32 %v330, %v1190
    %v1255 = vsub.f32 %v331, %v1191
    %v1256 = vsub.f32 %v332, %v1192
    %v1257 = vsub.f32 %v333, %v1193
    %v1258 = vsub.f32 %v334, %v1194
    %v1259 = vsub.f32 %v335, %v1195
    %v1260 = vsub.f32 %v336, %v1196
    %v1261 = vsub.f32 %v337, %v1197
    %v1262 = vsub.f32 %v338, %v1198
    %v1263 = vsub.f32 %v339, %v1199
    %v1264 = vsub.f32 %v340, %v1200
    %v1265 = vsub.f32 %v341, %v1201
    %v1266 = vsub.f32 %v342, %v1202
    %v1267 = vsub.f32 %v343, %v1203
    %v1268 = vsub.f32 %v344, %v1204
    %v1269 = vsub.f32 %v345, %v1205
    %v1270 = vsub.f32 %v346, %v1206
    %v1271 = vsub.f32 %v347, %v1207
    %v1272 = vsub.f32 %v348, %v1208
    %v1273 = vsub.f32 %v349, %v1209
    %v1274 = vsub.f32 %v350, %v1210
    %v1275 = vsub.f32 %v351, %v1211
    %v1276 = vsub.f32 %v352, %v1212
    %v1277 = vsub.f32 %v353, %v1213
    %v1278 = vsub.f32 %v354, %v1214
    %v1279 = vsub.f32 %v355, %v1215
    %v1280 = vsub.f32 %v356, %v1216
    %v1281 = vsub.f32 %v357, %v1217
    %v1282 = vsub.f32 %v358, %v1218
    %v1283 = vsub.f32 %v359, %v1219
    %v1284 = vsub.f32 %v360, %v1220
    %v1285 = vsub.f32 %v361, %v1221
    %v1286 = vsub.f32 %v362, %v1222
    %v1287 = vsub.f32 %v363, %v1223
    %v1288 = vsub.f32 %v364, %v1224
    %v1289 = vsub.f32 %v365, %v1225
    %v1290 = vpack.c.bf16 %v1228, %v1226
    %v1291 = vpack.c.bf16 %v1229, %v1227
    %v1292 = vpack.c.bf16 %v1232, %v1230
    %v1293 = vpack.c.bf16 %v1233, %v1231
    %v1294 = vpack.c.bf16 %v1236, %v1234
    %v1295 = vpack.c.bf16 %v1237, %v1235
    %v1296 = vpack.c.bf16 %v1240, %v1238
    %v1297 = vpack.c.bf16 %v1241, %v1239
    %v1298 = vpack.c.bf16 %v1244, %v1242
    %v1299 = vpack.c.bf16 %v1245, %v1243
    %v1300 = vpack.c.bf16 %v1248, %v1246
    %v1301 = vpack.c.bf16 %v1249, %v1247
    %v1302 = vpack.c.bf16 %v1252, %v1250
    %v1303 = vpack.c.bf16 %v1253, %v1251
    %v1304 = vpack.c.bf16 %v1256, %v1254
    %v1305 = vpack.c.bf16 %v1257, %v1255
    %v1306 = vpack.c.bf16 %v1260, %v1258
    %v1307 = vpack.c.bf16 %v1261, %v1259
    %v1308 = vpack.c.bf16 %v1264, %v1262
    %v1309 = vpack.c.bf16 %v1265, %v1263
    %v1310 = vpack.c.bf16 %v1268, %v1266
    %v1311 = vpack.c.bf16 %v1269, %v1267
    %v1312 = vpack.c.bf16 %v1272, %v1270
    %v1313 = vpack.c.bf16 %v1273, %v1271
    %v1314 = vpack.c.bf16 %v1276, %v1274
    %v1315 = vpack.c.bf16 %v1277, %v1275
    %v1316 = vpack.c.bf16 %v1280, %v1278
    %v1317 = vpack.c.bf16 %v1281, %v1279
    %v1318 = vpack.c.bf16 %v1284, %v1282
    %v1319 = vpack.c.bf16 %v1285, %v1283
    %v1320 = vpack.c.bf16 %v1288, %v1286
    %v1321 = vpack.c.bf16 %v1289, %v1287
    %1322 = vmatprep.subr.bf16.mxu0 %v1291
    %1323 = vmatpush1.bf16.msra.mxu0 %v1290
    %1324 = vmatprep.subr.bf16.mxu0 %v1293
    %1325 = vmatpush1.bf16.msra.mxu0 %v1292
    %1326 = vmatprep.subr.bf16.mxu0 %v1295
    %1327 = vmatpush1.bf16.msra.mxu0 %v1294
    %1328 = vmatprep.subr.bf16.mxu0 %v1297
    %1329 = vmatpush1.bf16.msra.mxu0 %v1296
    %1330 = vmatprep.subr.bf16.mxu0 %v1299
    %1331 = vmatpush1.bf16.msra.mxu0 %v1298
    %1332 = vmatprep.subr.bf16.mxu0 %v1301
    %1333 = vmatpush1.bf16.msra.mxu0 %v1300
    %1334 = vmatprep.subr.bf16.mxu0 %v1303
    %1335 = vmatpush1.bf16.msra.mxu0 %v1302
    %1336 = vmatprep.subr.bf16.mxu0 %v1305
    %1337 = vmatpush1.bf16.msra.mxu0 %v1304
    %1338 = vmatprep.subr.bf16.mxu0 %v1307
    %1339 = vmatpush1.bf16.msra.mxu0 %v1306
    %1340 = vmatprep.subr.bf16.mxu0 %v1309
    %1341 = vmatpush1.bf16.msra.mxu0 %v1308
    %1342 = vmatprep.subr.bf16.mxu0 %v1311
    %1343 = vmatpush1.bf16.msra.mxu0 %v1310
    %1344 = vmatprep.subr.bf16.mxu0 %v1313
    %1345 = vmatpush1.bf16.msra.mxu0 %v1312
    %1346 = vmatprep.subr.bf16.mxu0 %v1315
    %1347 = vmatpush1.bf16.msra.mxu0 %v1314
    %1348 = vmatprep.subr.bf16.mxu0 %v1317
    %1349 = vmatpush1.bf16.msra.mxu0 %v1316
    %1350 = vmatprep.subr.bf16.mxu0 %v1319
    %1351 = vmatpush1.bf16.msra.mxu0 %v1318
    %1352 = vmatprep.subr.bf16.mxu0 %v1321
    %1353 = vmatpush1.bf16.msra.mxu0 %v1320
    %1354 = vmatprep.mubr.bf16.mxu0 %v141
    %1355 = vmatmul.mubr.bf16.gmra.mrb[0].mxu0 %v140
    %v1356 = vpop.f32.mrb[0].mxu0
    %v1357 = vadd.f32 0.0, %v1356
    %v1358 = vpop.f32.mrb[0].mxu0
    %v1359 = vadd.f32 0.0, %v1358
    %v1360 = vpop.f32.mrb[0].mxu0
    %v1361 = vpop.f32.mrb[0].mxu0
    %1362 = vdwg.mxu0
    %1363 = vmatprep.subr.bf16.mxu0 %v1131
    %1364 = vmatpush1.bf16.msra.mxu0 %v1130
    %1365 = vmatprep.subr.bf16.mxu0 %v1133
    %1366 = vmatpush1.bf16.msra.mxu0 %v1132
    %1367 = vmatprep.subr.bf16.mxu0 %v1135
    %1368 = vmatpush1.bf16.msra.mxu0 %v1134
    %1369 = vmatprep.subr.bf16.mxu0 %v1137
    %1370 = vmatpush1.bf16.msra.mxu0 %v1136
    %1371 = vmatprep.subr.bf16.mxu0 %v1139
    %1372 = vmatpush1.bf16.msra.mxu0 %v1138
    %1373 = vmatprep.subr.bf16.mxu0 %v1141
    %1374 = vmatpush1.bf16.msra.mxu0 %v1140
    %1375 = vmatprep.subr.bf16.mxu0 %v1143
    %1376 = vmatpush1.bf16.msra.mxu0 %v1142
    %1377 = vmatprep.subr.bf16.mxu0 %v1145
    %1378 = vmatpush1.bf16.msra.mxu0 %v1144
    %1379 = vmatprep.subr.bf16.mxu0 %v1147
    %1380 = vmatpush1.bf16.msra.mxu0 %v1146
    %1381 = vmatprep.subr.bf16.mxu0 %v1149
    %1382 = vmatpush1.bf16.msra.mxu0 %v1148
    %1383 = vmatprep.subr.bf16.mxu0 %v1151
    %1384 = vmatpush1.bf16.msra.mxu0 %v1150
    %1385 = vmatprep.subr.bf16.mxu0 %v1153
    %1386 = vmatpush1.bf16.msra.mxu0 %v1152
    %1387 = vmatprep.subr.bf16.mxu0 %v1155
    %1388 = vmatpush1.bf16.msra.mxu0 %v1154
    %1389 = vmatprep.subr.bf16.mxu0 %v1157
    %1390 = vmatpush1.bf16.msra.mxu0 %v1156
    %1391 = vmatprep.subr.bf16.mxu0 %v1159
    %1392 = vmatpush1.bf16.msra.mxu0 %v1158
    %1393 = vmatprep.subr.bf16.mxu0 %v1161
    %1394 = vmatpush1.bf16.msra.mxu0 %v1160
    %1395 = vmatprep.mubr.bf16.mxu0 %v141
    %1396 = vmatmul.mubr.bf16.gmra.mrb[0].mxu0 %v140
    %v1397 = vpop.f32.mrb[0].mxu0
    %v1398 = vadd.f32 %v1357, %v1397
    %v1399 = vpop.f32.mrb[0].mxu0
    %v1400 = vadd.f32 %v1359, %v1399
    %v1401 = vpop.f32.mrb[0].mxu0
    %v1402 = vpop.f32.mrb[0].mxu0
    %1403 = vdwg.mxu0
    %s1404 = smul.addr %s568, 8
    %s1405 = scalar_lea.vmem [#allocation5], %s1404
    %1406 = vst [vmem:[%s1405] sm:$0xff] %v1398
    %1407 = vst [vmem:[%s1405 + $0x8] sm:$0xff] %v1400
    %p1408 = scmp.eq.s32.totalorder 0, 0
    // Predicated region
    $region42: #{tpu_custom_call.1} parent=1 // pred_check
      %p1409 = pneg %p1408
    $region43: #{tpu_custom_call.1} parent=1 // pred_check_branch
      %1411 = sbr.rel (%p1409) target = $region45
    $region44: #{tpu_custom_call.1} parent=1 // pred_region
      %s1412 = sld [smem:[#allocation6]]
      %v1413 = vld [vmem:[%s5] sm:$0x3]
      %v1414 = vld [vmem:[#allocation2] ss:$8 sm:$0x3]
      %s1415 = scalar_lea.vmem [#allocation2], 1
      %v1416 = vld [vmem:[%s1415] ss:$8 sm:$0x3]
      %v1417 = vld [vmem:[#allocation5] ss:$8 sm:$0x3]
      %v1418 = vsub.f32 0.0, %v1417
      %s1419 = scalar_lea.vmem [#allocation3], 2
      %v1420 = vld [vmem:[%s1419] ss:$8 sm:$0x3]
      %s1421 = scalar_lea.vmem [#allocation4], 3
      %v1422 = vld [vmem:[%s1421] ss:$8 sm:$0x3]
      %v1423 = vadd.f32 %v1420, %v1422
      %v1424 = vsub.f32 0.0, %v1423
      %s1425 = scalar_lea.vmem [#allocation3], 3
      %v1426 = vld [vmem:[%s1425] ss:$8 sm:$0x3]
      %s1427 = scalar_lea.vmem [#allocation4], 2
      %v1428 = vld [vmem:[%s1427] ss:$8 sm:$0x3]
      %v1429 = vadd.f32 %v1426, %v1428
      %v1430 = vsub.f32 0.0, %v1429
      %v1431 = vmax.f32 %v1414, 1.0
      %v1432 = vrcp.pop %v1431
      %v1433 = vmul.f32 %v1418, %v1432
      %vm1434 = vcmp.gt.f32.partialorder %v80, 0.0
      %v1435 = vsel %vm1434, %v1433, -1e+30
      %v1437 = vlaneseq
      %v1438 = vshrl.u32 %v1437, 7
      %v1439 = vsub.s32 0, %v1438
      %v1440 = vrot.slane %v1435, %v1439
      %v1441 = vlaneseq
      %v1442 = vshrl.u32 %v1441, 7
      %v1443 = vsub.s32 1, %v1442
      %v1444 = vrot.slane %v1435, %v1443
      %vm1447 = vcmask 1040384
      %v1448 = vsel %vm1447, %v1440, -inf
      %v1449 = vsel %vm1447, %v1444, -inf
      %v1450 = vmax.f32 %v1448, %v1449
      %1451 = vmax.xlane.f32.xlu0 %v1450
      %v1452 = vpop.xlane.xlu0 %1451
      %v1453 = vlaneseq
      %v1454 = vand.u32 %v1453, 127
      %v1455 = vadd.s32 %v1454, 128
      %v1457 = vlaneseq
      %v1458 = vshrl.u32 %v1457, 7
      %v1459 = vsub.s32 0, %v1458
      %v1460 = vrot.slane %v1452, %v1459
      %vm1462 = vcmp.ge.f32.partialorder %v1435, %v1460
      %v1463 = vcombine.low %v1454, %v1455
      %v1465 = vunpack.c.l.s4 1966171168
      %v1466 = vunpack.c.0.s8 %v1465
      %v1467 = vlaneseq
      %v1468 = vshrl.u32 %v1467, 7
      %v1469 = vsub.s32 %v1466, %v1468
      %v1470 = vrot.slane %v1463, %v1469
      %v1472 = vunpack.c.l.s4 1966171168
      %v1473 = vunpack.c.0.s8 %v1472
      %v1474 = vlaneseq
      %v1475 = vshrl.u32 %v1474, 7
      %v1476 = vsub.s32 %v1473, %v1475
      %v1477 = vrot.slane %v1470, %v1476
      %v1478 = vsel %vm1462, %v1477, 256
      %v1479 = vlaneseq
      %v1480 = vshrl.u32 %v1479, 7
      %v1481 = vsub.s32 0, %v1480
      %v1482 = vrot.slane %v1478, %v1481
      %v1483 = vlaneseq
      %v1484 = vshrl.u32 %v1483, 7
      %v1485 = vsub.s32 1, %v1484
      %v1486 = vrot.slane %v1478, %v1485
      %v1487 = vsel %vm1447, %v1482, 2147483647
      %v1488 = vsel %vm1447, %v1486, 2147483647
      %vm1489 = vcmp.lt.s32.totalorder %v1487, %v1488
      %v1490 = vsel %vm1489, %v1487, %v1488
      %v1491 = vand.u32 %v1490, 65535
      %v1492 = vshra.s32 %v1490, 16
      %v1493 = vcvt.s32.f32 %v1491
      %v1494 = vcvt.s32.f32 %v1492
      %1495 = vmin.xlane.f32.xlu0 %v1494
      %v1496 = vpop.xlane.xlu0 %1495
      %vm1497 = vcmp.eq.f32.partialorder %v1494, %v1496
      %v1498 = vsel %vm1497, %v1493, inf
      %1499 = vmin.xlane.f32.xlu0 %v1498
      %v1500 = vpop.xlane.xlu0 %1499
      %v1501 = vcvt.f32.s32 %v1500
      %v1502 = vcvt.f32.s32 %v1496
      %v1503 = vshll.u32 %v1502, 16
      %v1504 = vadd.s32 %v1503, %v1501
      %vm1505 = vcmp.eq.s32.totalorder %v1454, %v1504
      %vm1506 = vcmp.eq.s32.totalorder %v1455, %v1504
      %v1507 = vlaneseq
      %v1508 = vshrl.u32 %v1507, 7
      %v1509 = vsub.s32 0, %v1508
      %v1510 = vrot.slane %v1413, %v1509
      %v1511 = vlaneseq
      %v1512 = vshrl.u32 %v1511, 7
      %v1513 = vsub.s32 1, %v1512
      %v1514 = vrot.slane %v1413, %v1513
      %v1515 = vsel %vm1505, %v1510, 0
      %v1516 = vsel %vm1506, %v1514, 0
      %v1517 = vsel %vm1447, %v1515, 0
      %v1518 = vsel %vm1447, %v1516, 0
      %v1519 = vadd.s32 %v1517, %v1518
      %v1520 = vand.u32 %v1519, 65535
      %v1521 = vshrl.u32 %v1519, 16
      %v1522 = vcvt.s32.f32 %v1520
      %v1523 = vcvt.s32.f32 %v1521
      %1524 = vadd.xlane.f32.xlu0 %v1522
      %v1525 = vpop.xlane.xlu0 %1524
      %1526 = vadd.xlane.f32.xlu0 %v1523
      %v1527 = vpop.xlane.xlu0 %1526
      %v1528 = vcvt.f32.s32 %v1525
      %v1529 = vcvt.f32.s32 %v1527
      %v1530 = vshll.u32 %v1529, 16
      %v1531 = vadd.s32 %v1530, %v1528
      %v1532 = vlaneseq
      %v1533 = vshrl.u32 %v1532, 7
      %v1534 = vsub.s32 0, %v1533
      %v1535 = vrot.slane %v1531, %v1534
      %vm1536 = vcmp.eq.s32.totalorder %v1413, %v1535
      %vm1537 = vcmp.gt.f32.partialorder %v1416, 0.0
      %v1538 = vmax.f32 %v1416, 1.0
      %v1539 = vrcp.pop %v1538
      %v1540 = vmul.f32 1.0, %v1539
      %v1541 = vmul.f32 %v1424, %v1540
      %v1542 = vsel %vm1537, %v1541, -1e+30
      %v1543 = vmul.f32 %v1430, %v1540
      %v1544 = vsel %vm1537, %v1543, -1e+30
      %vm1545 = vcmp.ge.f32.partialorder %v1542, %v1544
      %v1546 = vsel %vm1545, 1, 2
      %v1547 = vmax.f32 %v1542, %v1544
      %v1548 = vstv %s1412
      %vm1549 = vcmp.ge.f32.partialorder %v1547, %v1548
      %v1550 = vsel %vm1549, %v1546, 0
      %v1551 = vsel %vm1536, %v1550, 4294967295
      %v1552 = vsel %vm71, %v69, %v1551
      %v1553 = vlaneseq
      %vm1554 = vcmp.ge.s32.totalorder %v1553, 0
      %vm1555 = vcmp.lt.s32.totalorder %v1553, 256
      %vm1556 = vmand %vm1554, %vm1555
      %1557 = vst.msk [vmem:[#allocation13] sm:$0x3] %vm1556, %v1552
    $region45: #{tpu_custom_call.1} parent=1 // pred_fallthru
      _
    // Predicated region
    $region46: #{tpu_custom_call.1} parent=1 // pred_check
      _
    $region47: #{tpu_custom_call.1} parent=1 // pred_check_branch
      %1559 = sbr.rel (0) target = $region49
    $region48: #{tpu_custom_call.1} parent=1 // pred_region
      %s1561 = ssub.s32 32, 32
      %1562 = vsyncadd [#allocation9], %s1561
      %s1564 = sshll.u32 [#allocation13], 4
      %s1565 = int_to_ptr.vmem [resolvable:$true] %s1564
      %1567 = dma.vmem_to_hbm [thread:$0]  %s1565, 32, %s7, [#allocation9]
    $region49: #{tpu_custom_call.1} parent=1 // pred_fallthru
      _
    // Predicated region
    $region50: #{tpu_custom_call.1} parent=1 // pred_check
      _
    $region51: #{tpu_custom_call.1} parent=1 // pred_check_branch
      %1569 = sbr.rel (0) target = $region53
    $region52: #{tpu_custom_call.1} parent=1 // pred_region
      %1570 = dma.done [#allocation9], 32
    $region53: #{tpu_custom_call.1} parent=1 // pred_fallthru
      _
    %1571 = vsyncpa [#allocation8], 1
    %1572 = vsyncpa [#allocation11], 1
    %1573 = vsyncpa [#allocation9], 1

</llo_original>
